<compile_context>
chip_gen: v6e
topology: v6e:2x2x1
jax: 0.10.0
libtpu: 0.0.40
codegen_flags: <defaults>
</compile_context>

<pallas_src>
import functools

import jax
import jax.numpy as jnp
import numpy as np
from jax.experimental import pallas as pl
from jax.experimental.pallas import tpu as pltpu


# ----------------------------------------------------------------------------
# Fused Pallas kernels (one grid step == one image)
# ----------------------------------------------------------------------------

def _stem_kernel(p_ref, w_ref, s_ref, b_ref, tpool_ref, o_ref):
    """3x3/s2 conv (as im2col matmul) + BN + ReLU, then 3x3/s2 maxpool via tap selection."""
    p = p_ref[0]                                                       # (M1, 27) bf16
    y = jnp.dot(p, w_ref[...], preferred_element_type=jnp.float32)    # (M1, 128)
    y = jnp.maximum(y * s_ref[...] + b_ref[...], 0.0).astype(jnp.bfloat16)
    out = None
    for k in range(9):                                                 # maxpool taps (ReLU'd
        sel = jnp.dot(tpool_ref[k], y,                                 #  input -> 0-pad == -inf pad)
                      preferred_element_type=jnp.float32)
        out = sel if out is None else jnp.maximum(out, sel)
    o_ref[0] = out.astype(o_ref.dtype)


def _block_s1_kernel(x_ref, w21_ref, s21_ref, b21_ref, tdw_ref,
                     wd2_ref, sd2_ref, bd2_ref, w22_ref, s22_ref, b22_ref,
                     pe_ref, o_ref, *, center_only):
    """Fused stride-1 ShuffleNet block: pw1+BN+ReLU -> dw3x3+BN -> pw2+BN+ReLU,
    with the passthrough half and the channel shuffle folded into scatter matmuls."""
    x = x_ref[0]                                                       # (M, Cp) bf16
    # branch2 pw1 (only the logical x2 rows of w21 are non-zero)
    t = jnp.dot(x, w21_ref[...], preferred_element_type=jnp.float32)
    t = jnp.maximum(t * s21_ref[...] + b21_ref[...], 0.0).astype(jnp.bfloat16)
    # depthwise 3x3 (stride 1) via one-hot tap-selection matmuls; f32 VPU MAC
    if center_only:                                                    # 1x1 feature map
        d = t.astype(jnp.float32) * wd2_ref[4]
    else:
        d = jnp.zeros((tdw_ref.shape[1], wd2_ref.shape[-1]), jnp.float32)
        for k in range(9):
            d = d + jnp.dot(tdw_ref[k], t,
                            preferred_element_type=jnp.float32) * wd2_ref[k]
    d = (d * sd2_ref[...] + bd2_ref[...]).astype(jnp.bfloat16)
    # branch2 pw2 scattered to the odd (shuffled) output channels
    y2 = jnp.dot(d, w22_ref[...], preferred_element_type=jnp.float32)
    y2 = jnp.maximum(y2 * s22_ref[...] + b22_ref[...], 0.0)
    # x1 passthrough scattered to the even (shuffled) output channels
    y1 = jnp.dot(x, pe_ref[...], preferred_element_type=jnp.float32)
    o_ref[0] = (y1 + y2).astype(o_ref.dtype)


def _block_s2_kernel(x_ref, tdw_ref, wd1_ref, sd1_ref, bd1_ref,
                     wb1_ref, sb1_ref, bb1_ref,
                     w21_ref, s21_ref, b21_ref, wd2_ref, sd2_ref, bd2_ref,
                     w22_ref, s22_ref, b22_ref, o_ref):
    """Fused stride-2 ShuffleNet block: both branches + channel shuffle in one kernel."""
    x = x_ref[0]                                                       # (M, Cin_p) bf16
    mo = tdw_ref.shape[1]
    # branch2 pw1 + BN + ReLU
    t = jnp.dot(x, w21_ref[...], preferred_element_type=jnp.float32)
    t = jnp.maximum(t * s21_ref[...] + b21_ref[...], 0.0).astype(jnp.bfloat16)
    # 3x3 depthwise / stride 2 on both branches via shared tap-selection matmuls
    d1 = jnp.zeros((mo, x.shape[-1]), jnp.float32)
    d2 = jnp.zeros((mo, t.shape[-1]), jnp.float32)
    for k in range(9):
        sel = tdw_ref[k]                                               # (Mo, M) bf16 one-hot
        d1 = d1 + jnp.dot(sel, x, preferred_element_type=jnp.float32) * wd1_ref[k]
        d2 = d2 + jnp.dot(sel, t, preferred_element_type=jnp.float32) * wd2_ref[k]
    d1 = (d1 * sd1_ref[...] + bd1_ref[...]).astype(jnp.bfloat16)
    d2 = (d2 * sd2_ref[...] + bd2_ref[...]).astype(jnp.bfloat16)
    # branch1 pw -> even output channels, branch2 pw2 -> odd output channels (shuffle folded)
    y1 = jnp.dot(d1, wb1_ref[...], preferred_element_type=jnp.float32)
    y1 = jnp.maximum(y1 * sb1_ref[...] + bb1_ref[...], 0.0)
    y2 = jnp.dot(d2, w22_ref[...], preferred_element_type=jnp.float32)
    y2 = jnp.maximum(y2 * s22_ref[...] + b22_ref[...], 0.0)
    o_ref[0] = (y1 + y2).astype(o_ref.dtype)


def _head_kernel(x_ref, w5_ref, s5_ref, b5_ref, fw_ref, fb_ref, o_ref):
    """Fused conv5(1x1)+BN+ReLU -> global average pool -> FC (91 padded to 128)."""
    x = x_ref[0]                                                       # (M, 512) bf16
    y = jnp.dot(x, w5_ref[...], preferred_element_type=jnp.float32)   # (M, 1024)
    y = jnp.maximum(y * s5_ref[...] + b5_ref[...], 0.0)
    pooled = jnp.mean(y, axis=0, keepdims=True).astype(jnp.bfloat16)  # (1, 1024)
    out = jnp.dot(pooled, fw_ref[...],
                  preferred_element_type=jnp.float32) + fb_ref[...]
    o_ref[0] = out.astype(o_ref.dtype)


# ----------------------------------------------------------------------------
# pallas_call plumbing
# ----------------------------------------------------------------------------

def _batch_spec(shape):
    nd = len(shape)

    def imap(b):
        return (b,) + (0,) * (nd - 1)

    return pl.BlockSpec((1,) + tuple(shape[1:]), imap)


def _const_spec(arr):
    nd = arr.ndim

    def imap(b):
        return (0,) * nd

    return pl.BlockSpec(arr.shape, imap)


def _run(kernel, xb, consts, out_tail, out_dtype):
    """Run `kernel` with a batch grid; xb is (N, ...), consts are whole-array operands."""
    n = xb.shape[0]
    return pl.pallas_call(
        kernel,
        grid=(n,),
        in_specs=[_batch_spec(xb.shape)] + [_const_spec(c) for c in consts],
        out_specs=_batch_spec((n,) + tuple(out_tail)),
        out_shape=jax.ShapeDtypeStruct((n,) + tuple(out_tail), out_dtype),
        compiler_params=pltpu.CompilerParams(dimension_semantics=("parallel",)),
    )(xb, *consts)


# ----------------------------------------------------------------------------
# Host-side constants: one-hot tap-selection matrices for 3x3 / pad=1 windows
# ----------------------------------------------------------------------------

_SEL_CACHE = {}


def _tap_select(h, w, stride):
    """(9, Ho*Wo, H*W) one-hot matrices: tap k of output pos o selects input pos (or 0 = pad)."""
    key = (h, w, stride)
    if key not in _SEL_CACHE:
        ho = (h - 1) // stride + 1
        wo = (w - 1) // stride + 1
        m = np.zeros((9, ho * wo, h * w), np.float32)
        for kh in range(3):
            for kw in range(3):
                k = kh * 3 + kw
                for oh in range(ho):
                    ih = oh * stride + kh - 1
                    if not 0 <= ih < h:
                        continue
                    for ow in range(wo):
                        iw = ow * stride + kw - 1
                        if 0 <= iw < w:
                            m[k, oh * wo + ow, ih * w + iw] = 1.0
        _SEL_CACHE[key] = (jnp.asarray(m, jnp.bfloat16), ho, wo)
    return _SEL_CACHE[key]


# ----------------------------------------------------------------------------
# Forward pass
# ----------------------------------------------------------------------------

def _block_call(p, x, tdw, mo, center_only):
    cout_p = p["w22"].shape[1]
    if p["stride"] == 1:
        kern = functools.partial(_block_s1_kernel, center_only=center_only)
        consts = [p["w21"], p["s21"], p["b21"], tdw, p["wd2"], p["sd2"], p["bd2"],
                  p["w22"], p["s22"], p["b22"], p["pe"]]
    else:
        kern = _block_s2_kernel
        consts = [tdw, p["wd1"], p["sd1"], p["bd1"], p["wb1"], p["sb1"], p["bb1"],
                  p["w21"], p["s21"], p["b21"], p["wd2"], p["sd2"], p["bd2"],
                  p["w22"], p["s22"], p["b22"]]
    return _run(kern, x, consts, (mo, cout_p), jnp.bfloat16)


def test_encoder_forward(params, images_nchw):
    """TestEncoder forward: ShuffleNetV2-x1.0 backbone + Linear(1024, 91)."""
    x = jnp.transpose(images_nchw, (0, 2, 3, 1)).astype(jnp.float32)    # NCHW -> NHWC
    n, h, w, cin = x.shape

    # Stem im2col on the tiny 3-channel input (tap-major, channel-minor; no transpose).
    h1, w1 = (h - 1) // 2 + 1, (w - 1) // 2 + 1
    xp = jnp.pad(x, ((0, 0), (1, 1), (1, 1), (0, 0)))
    taps = [xp[:, kh:kh + 2 * (h1 - 1) + 1:2, kw:kw + 2 * (w1 - 1) + 1:2, :]
            for kh in range(3) for kw in range(3)]
    patches = jnp.concatenate(taps, axis=-1).reshape(n, h1 * w1, 9 * cin)
    patches = patches.astype(jnp.bfloat16)

    tpool, h2, w2 = _tap_select(h1, w1, 2)
    st = params["stem"]
    x = _run(_stem_kernel, patches, [st["w"], st["s"], st["b"], tpool],
             (h2 * w2, st["w"].shape[1]), jnp.bfloat16)

    ch, cw = h2, w2
    for p in params["stages"]:
        tdw, ho, wo = _tap_select(ch, cw, p["stride"])
        x = _block_call(p, x, tdw, ho * wo,
                        center_only=(p["stride"] == 1 and ch * cw == 1))
        ch, cw = ho, wo

    hd = params["head"]
    out = _run(_head_kernel, x, [hd["w5"], hd["s5"], hd["b5"], hd["fw"], hd["fb"]],
               (1, hd["fw"].shape[1]), jnp.float32)
    return out.reshape(n, -1)[:, :91]                                   # drop FC lane padding


# ----------------------------------------------------------------------------
# Parameter construction: synthetic logical params (same shapes as torchvision
# shufflenet_v2_x1_0 with fc = Linear(1024, 91)), packed into padded / shuffle-
# folded physical kernel weights.
# ----------------------------------------------------------------------------

def _rup(c, m=128):
    return (c + m - 1) // m * m


def _as_bf16(a):
    return jnp.asarray(a, jnp.bfloat16)


def _pack_pw(w2d, rows_p, cols_p, col_offset, col_stride, row_offset):
    w2d = np.asarray(w2d, np.float32)
    kin, kout = w2d.shape
    out = np.zeros((rows_p, cols_p), np.float32)
    out[row_offset:row_offset + kin, col_offset + col_stride * np.arange(kout)] = w2d
    return _as_bf16(out)


def _pack_vec(v, cols_p):
    v = np.asarray(v, np.float32)
    out = np.zeros((1, cols_p), np.float32)
    out[0, :v.shape[0]] = v
    return jnp.asarray(out, jnp.float32)


def _pack_vec_scatter(v, cols_p, offset, stride):
    v = np.asarray(v, np.float32)
    out = np.zeros((1, cols_p), np.float32)
    out[0, offset + stride * np.arange(v.shape[0])] = v
    return jnp.asarray(out, jnp.float32)


def _pack_dw(w, c_p):
    w = np.asarray(w, np.float32)                       # (3, 3, c)
    out = np.zeros((9, 1, c_p), np.float32)
    out[:, 0, :w.shape[-1]] = w.reshape(9, w.shape[-1])
    return jnp.asarray(out, jnp.float32)


class _Init:
    def __init__(self, key):
        self._key = key

    def _next(self):
        self._key, k = jax.random.split(self._key)
        return k

    def _folded_bn(self, c):
        eps = 1e-5
        gamma = 1.0 + 0.1 * jax.random.normal(self._next(), (c,), jnp.float32)
        beta = 0.1 * jax.random.normal(self._next(), (c,), jnp.float32)
        mean = 0.1 * jax.random.normal(self._next(), (c,), jnp.float32)
        var = 1.0 + 0.1 * jax.random.uniform(self._next(), (c,), jnp.float32)
        scale = gamma / jnp.sqrt(var + eps)
        bias = beta - mean * scale
        return scale, bias

    def conv_bn(self, cin, cout, k):
        fan_in = cin * k * k
        w = jax.random.normal(self._next(), (k, k, cin, cout), jnp.float32)
        w = w * jnp.sqrt(2.0 / fan_in)
        scale, bias = self._folded_bn(cout)
        return w, scale, bias

    def dw_bn(self, c):
        w = jax.random.normal(self._next(), (3, 3, c), jnp.float32) * jnp.sqrt(2.0 / 9.0)
        scale, bias = self._folded_bn(c)
        return w, scale, bias

    def linear(self, cin, cout):
        bound = 1.0 / jnp.sqrt(float(cin))
        w = jax.random.uniform(self._next(), (cin, cout), jnp.float32, -bound, bound)
        b = jax.random.uniform(self._next(), (cout,), jnp.float32, -bound, bound)
        return w, b


def _build_block(init, inp, oup, stride):
    bf = oup // 2
    cin_p, cout_p, cb_p = _rup(inp), _rup(oup), _rup(bf)
    p = {"stride": stride}
    if stride == 2:
        wd, sd, bd = init.dw_bn(inp)                                   # branch1 dw + BN
        p["wd1"], p["sd1"], p["bd1"] = _pack_dw(wd, cin_p), _pack_vec(sd, cin_p), _pack_vec(bd, cin_p)
        w, s, b = init.conv_bn(inp, bf, 1)                             # branch1 pw -> even cols
        p["wb1"] = _pack_pw(np.asarray(w).reshape(inp, bf), cin_p, cout_p, 0, 2, 0)
        p["sb1"] = _pack_vec_scatter(s, cout_p, 0, 2)
        p["bb1"] = _pack_vec_scatter(b, cout_p, 0, 2)
        in2, row_off = inp, 0
    else:
        in2, row_off = bf, bf                                          # x2 = logical chans [bf, 2bf)
    w, s, b = init.conv_bn(in2, bf, 1)                                 # branch2 pw1
    p["w21"] = _pack_pw(np.asarray(w).reshape(in2, bf), cin_p, cb_p, 0, 1, row_off)
    p["s21"], p["b21"] = _pack_vec(s, cb_p), _pack_vec(b, cb_p)
    wd, sd, bd = init.dw_bn(bf)                                        # branch2 dw + BN
    p["wd2"], p["sd2"], p["bd2"] = _pack_dw(wd, cb_p), _pack_vec(sd, cb_p), _pack_vec(bd, cb_p)
    w, s, b = init.conv_bn(bf, bf, 1)                                  # branch2 pw2 -> odd cols
    p["w22"] = _pack_pw(np.asarray(w).reshape(bf, bf), cb_p, cout_p, 1, 2, 0)
    p["s22"] = _pack_vec_scatter(s, cout_p, 1, 2)
    p["b22"] = _pack_vec_scatter(b, cout_p, 1, 2)
    if stride == 1:                                                    # x1 passthrough -> even cols
        pe = np.zeros((cin_p, cout_p), np.float32)
        pe[np.arange(bf), 2 * np.arange(bf)] = 1.0
        p["pe"] = _as_bf16(pe)
    return p


def build_params(key):
    init = _Init(key)
    stages_repeats = [4, 8, 4]
    stages_out = [24, 116, 232, 464, 1024]
    params = {}

    w, s, b = init.conv_bn(3, stages_out[0], 3)                        # stem conv
    c0p = _rup(stages_out[0])
    stem_w = np.zeros((27, c0p), np.float32)
    stem_w[:, :stages_out[0]] = np.asarray(w).reshape(27, stages_out[0])
    params["stem"] = {"w": _as_bf16(stem_w), "s": _pack_vec(s, c0p), "b": _pack_vec(b, c0p)}

    blocks = []
    inp = stages_out[0]
    for repeats, oup in zip(stages_repeats, stages_out[1:4]):
        blocks.append(_build_block(init, inp, oup, 2))
        for _ in range(repeats - 1):
            blocks.append(_build_block(init, oup, oup, 1))
        inp = oup
    params["stages"] = blocks

    w, s, b = init.conv_bn(inp, stages_out[4], 1)                      # conv5
    cin_p = _rup(inp)
    w5 = np.zeros((cin_p, stages_out[4]), np.float32)
    w5[:inp, :] = np.asarray(w).reshape(inp, stages_out[4])
    fw, fb = init.linear(stages_out[4], 91)                            # fc (91 -> pad 128)
    ncls_p = _rup(91)
    fw_p = np.zeros((stages_out[4], ncls_p), np.float32)
    fw_p[:, :91] = np.asarray(fw)
    fb_p = np.zeros((1, ncls_p), np.float32)
    fb_p[0, :91] = np.asarray(fb)
    params["head"] = {"w5": _as_bf16(w5), "s5": _pack_vec(s, stages_out[4]),
                      "b5": _pack_vec(b, stages_out[4]),
                      "fw": _as_bf16(fw_p), "fb": jnp.asarray(fb_p, jnp.float32)}
    return params


# ----------------------------------------------------------------------------
# Main
# ----------------------------------------------------------------------------

if __name__ == "__main__":
    root = jax.random.PRNGKey(0)
    k_params, k_data = jax.random.split(root)

    params = build_params(k_params)
    # (batch, 3, image_size, image_size); 32x32 survives the /32 total downsampling cleanly.
    images = jax.random.normal(k_data, (2, 3, 32, 32), jnp.float32)

    out = test_encoder_forward(params, images)
    out = jax.block_until_ready(out)

    assert out.shape == (2, 91), out.shape
    assert out.dtype == jnp.float32
    assert bool(jnp.all(jnp.isfinite(out)))
    print("KERNEL_OK")
</pallas_src>

<mosaic_0001>
module attributes {stable_mosaic.version = 11 : i64} {
  func.func @_stem_kernel(%arg0: i32, %arg1: memref<1x256x27xbf16, #tpu.memory_space<vmem>>, %arg2: memref<27x128xbf16, #tpu.memory_space<vmem>>, %arg3: memref<1x128xf32, #tpu.memory_space<vmem>>, %arg4: memref<1x128xf32, #tpu.memory_space<vmem>>, %arg5: memref<9x64x256xbf16, #tpu.memory_space<vmem>>, %arg6: memref<1x64x128xbf16, #tpu.memory_space<vmem>>) attributes {dimension_semantics = [#tpu.dimension_semantics<parallel>], iteration_bounds = array<i64: 2>, scalar_prefetch = 0 : i64, scratch_operands = 0 : i64, tpu.core_type = #tpu.core_type<tc>, window_params = [{transform_indices = @transform_0, window_bounds = array<i64: 1, 256, 27>}, {pipeline_mode = #tpu.pipeline_mode<synchronous>, transform_indices = @transform_1, window_bounds = array<i64: 27, 128>}, {pipeline_mode = #tpu.pipeline_mode<synchronous>, transform_indices = @transform_2, window_bounds = array<i64: 1, 128>}, {pipeline_mode = #tpu.pipeline_mode<synchronous>, transform_indices = @transform_3, window_bounds = array<i64: 1, 128>}, {pipeline_mode = #tpu.pipeline_mode<synchronous>, transform_indices = @transform_4, window_bounds = array<i64: 9, 64, 256>}, {transform_indices = @transform_5, window_bounds = array<i64: 1, 64, 128>}]} {
    %c0 = arith.constant 0 : index
    %c0_0 = arith.constant 0 : index
    %c0_1 = arith.constant 0 : index
    %0 = vector.load %arg1[%c0, %c0_0, %c0_1] : memref<1x256x27xbf16, #tpu.memory_space<vmem>>, vector<1x256x27xbf16>
    %1 = vector.shape_cast %0 : vector<1x256x27xbf16> to vector<256x27xbf16>
    %c0_2 = arith.constant 0 : index
    %c0_3 = arith.constant 0 : index
    %2 = vector.load %arg2[%c0_2, %c0_3] : memref<27x128xbf16, #tpu.memory_space<vmem>>, vector<27x128xbf16>
    %cst = arith.constant dense<0.000000e+00> : vector<256x128xf32>
    %3 = tpu.matmul %1, %2, %cst {dimension_numbers = #tpu.dot_dimension_numbers<[1], [0], [0], [1], [0, 0, 1, 1], [], []>} : vector<256x27xbf16>, vector<27x128xbf16>, vector<256x128xf32> -> vector<256x128xf32>
    %c0_4 = arith.constant 0 : index
    %c0_5 = arith.constant 0 : index
    %4 = vector.load %arg3[%c0_4, %c0_5] : memref<1x128xf32, #tpu.memory_space<vmem>>, vector<1x128xf32>
    %5 = vector.broadcast %4 : vector<1x128xf32> to vector<256x128xf32>
    %6 = arith.mulf %3, %5 : vector<256x128xf32>
    %c0_6 = arith.constant 0 : index
    %c0_7 = arith.constant 0 : index
    %7 = vector.load %arg4[%c0_6, %c0_7] : memref<1x128xf32, #tpu.memory_space<vmem>>, vector<1x128xf32>
    %8 = vector.broadcast %7 : vector<1x128xf32> to vector<256x128xf32>
    %9 = arith.addf %6, %8 : vector<256x128xf32>
    %cst_8 = arith.constant 0.000000e+00 : f32
    %10 = vector.broadcast %cst_8 : f32 to vector<256x128xf32>
    %11 = arith.maximumf %9, %10 : vector<256x128xf32>
    %12 = arith.truncf %11 : vector<256x128xf32> to vector<256x128xbf16>
    %c0_9 = arith.constant 0 : index
    %c0_10 = arith.constant 0 : index
    %c0_11 = arith.constant 0 : index
    %13 = vector.load %arg5[%c0_9, %c0_10, %c0_11] : memref<9x64x256xbf16, #tpu.memory_space<vmem>>, vector<1x64x256xbf16>
    %14 = vector.shape_cast %13 : vector<1x64x256xbf16> to vector<64x256xbf16>
    %cst_12 = arith.constant dense<0.000000e+00> : vector<64x128xf32>
    %15 = tpu.matmul %14, %12, %cst_12 {dimension_numbers = #tpu.dot_dimension_numbers<[1], [0], [0], [1], [0, 0, 1, 1], [], []>} : vector<64x256xbf16>, vector<256x128xbf16>, vector<64x128xf32> -> vector<64x128xf32>
    %c1 = arith.constant 1 : index
    %c0_13 = arith.constant 0 : index
    %c0_14 = arith.constant 0 : index
    %16 = vector.load %arg5[%c1, %c0_13, %c0_14] : memref<9x64x256xbf16, #tpu.memory_space<vmem>>, vector<1x64x256xbf16>
    %17 = vector.shape_cast %16 : vector<1x64x256xbf16> to vector<64x256xbf16>
    %cst_15 = arith.constant dense<0.000000e+00> : vector<64x128xf32>
    %18 = tpu.matmul %17, %12, %cst_15 {dimension_numbers = #tpu.dot_dimension_numbers<[1], [0], [0], [1], [0, 0, 1, 1], [], []>} : vector<64x256xbf16>, vector<256x128xbf16>, vector<64x128xf32> -> vector<64x128xf32>
    %19 = arith.maximumf %15, %18 : vector<64x128xf32>
    %c2 = arith.constant 2 : index
    %c0_16 = arith.constant 0 : index
    %c0_17 = arith.constant 0 : index
    %20 = vector.load %arg5[%c2, %c0_16, %c0_17] : memref<9x64x256xbf16, #tpu.memory_space<vmem>>, vector<1x64x256xbf16>
    %21 = vector.shape_cast %20 : vector<1x64x256xbf16> to vector<64x256xbf16>
    %cst_18 = arith.constant dense<0.000000e+00> : vector<64x128xf32>
    %22 = tpu.matmul %21, %12, %cst_18 {dimension_numbers = #tpu.dot_dimension_numbers<[1], [0], [0], [1], [0, 0, 1, 1], [], []>} : vector<64x256xbf16>, vector<256x128xbf16>, vector<64x128xf32> -> vector<64x128xf32>
    %23 = arith.maximumf %19, %22 : vector<64x128xf32>
    %c3 = arith.constant 3 : index
    %c0_19 = arith.constant 0 : index
    %c0_20 = arith.constant 0 : index
    %24 = vector.load %arg5[%c3, %c0_19, %c0_20] : memref<9x64x256xbf16, #tpu.memory_space<vmem>>, vector<1x64x256xbf16>
    %25 = vector.shape_cast %24 : vector<1x64x256xbf16> to vector<64x256xbf16>
    %cst_21 = arith.constant dense<0.000000e+00> : vector<64x128xf32>
    %26 = tpu.matmul %25, %12, %cst_21 {dimension_numbers = #tpu.dot_dimension_numbers<[1], [0], [0], [1], [0, 0, 1, 1], [], []>} : vector<64x256xbf16>, vector<256x128xbf16>, vector<64x128xf32> -> vector<64x128xf32>
    %27 = arith.maximumf %23, %26 : vector<64x128xf32>
    %c4 = arith.constant 4 : index
    %c0_22 = arith.constant 0 : index
    %c0_23 = arith.constant 0 : index
    %28 = vector.load %arg5[%c4, %c0_22, %c0_23] : memref<9x64x256xbf16, #tpu.memory_space<vmem>>, vector<1x64x256xbf16>
    %29 = vector.shape_cast %28 : vector<1x64x256xbf16> to vector<64x256xbf16>
    %cst_24 = arith.constant dense<0.000000e+00> : vector<64x128xf32>
    %30 = tpu.matmul %29, %12, %cst_24 {dimension_numbers = #tpu.dot_dimension_numbers<[1], [0], [0], [1], [0, 0, 1, 1], [], []>} : vector<64x256xbf16>, vector<256x128xbf16>, vector<64x128xf32> -> vector<64x128xf32>
    %31 = arith.maximumf %27, %30 : vector<64x128xf32>
    %c5 = arith.constant 5 : index
    %c0_25 = arith.constant 0 : index
    %c0_26 = arith.constant 0 : index
    %32 = vector.load %arg5[%c5, %c0_25, %c0_26] : memref<9x64x256xbf16, #tpu.memory_space<vmem>>, vector<1x64x256xbf16>
    %33 = vector.shape_cast %32 : vector<1x64x256xbf16> to vector<64x256xbf16>
    %cst_27 = arith.constant dense<0.000000e+00> : vector<64x128xf32>
    %34 = tpu.matmul %33, %12, %cst_27 {dimension_numbers = #tpu.dot_dimension_numbers<[1], [0], [0], [1], [0, 0, 1, 1], [], []>} : vector<64x256xbf16>, vector<256x128xbf16>, vector<64x128xf32> -> vector<64x128xf32>
    %35 = arith.maximumf %31, %34 : vector<64x128xf32>
    %c6 = arith.constant 6 : index
    %c0_28 = arith.constant 0 : index
    %c0_29 = arith.constant 0 : index
    %36 = vector.load %arg5[%c6, %c0_28, %c0_29] : memref<9x64x256xbf16, #tpu.memory_space<vmem>>, vector<1x64x256xbf16>
    %37 = vector.shape_cast %36 : vector<1x64x256xbf16> to vector<64x256xbf16>
    %cst_30 = arith.constant dense<0.000000e+00> : vector<64x128xf32>
    %38 = tpu.matmul %37, %12, %cst_30 {dimension_numbers = #tpu.dot_dimension_numbers<[1], [0], [0], [1], [0, 0, 1, 1], [], []>} : vector<64x256xbf16>, vector<256x128xbf16>, vector<64x128xf32> -> vector<64x128xf32>
    %39 = arith.maximumf %35, %38 : vector<64x128xf32>
    %c7 = arith.constant 7 : index
    %c0_31 = arith.constant 0 : index
    %c0_32 = arith.constant 0 : index
    %40 = vector.load %arg5[%c7, %c0_31, %c0_32] : memref<9x64x256xbf16, #tpu.memory_space<vmem>>, vector<1x64x256xbf16>
    %41 = vector.shape_cast %40 : vector<1x64x256xbf16> to vector<64x256xbf16>
    %cst_33 = arith.constant dense<0.000000e+00> : vector<64x128xf32>
    %42 = tpu.matmul %41, %12, %cst_33 {dimension_numbers = #tpu.dot_dimension_numbers<[1], [0], [0], [1], [0, 0, 1, 1], [], []>} : vector<64x256xbf16>, vector<256x128xbf16>, vector<64x128xf32> -> vector<64x128xf32>
    %43 = arith.maximumf %39, %42 : vector<64x128xf32>
    %c8 = arith.constant 8 : index
    %c0_34 = arith.constant 0 : index
    %c0_35 = arith.constant 0 : index
    %44 = vector.load %arg5[%c8, %c0_34, %c0_35] : memref<9x64x256xbf16, #tpu.memory_space<vmem>>, vector<1x64x256xbf16>
    %45 = vector.shape_cast %44 : vector<1x64x256xbf16> to vector<64x256xbf16>
    %cst_36 = arith.constant dense<0.000000e+00> : vector<64x128xf32>
    %46 = tpu.matmul %45, %12, %cst_36 {dimension_numbers = #tpu.dot_dimension_numbers<[1], [0], [0], [1], [0, 0, 1, 1], [], []>} : vector<64x256xbf16>, vector<256x128xbf16>, vector<64x128xf32> -> vector<64x128xf32>
    %47 = arith.maximumf %43, %46 : vector<64x128xf32>
    %48 = arith.truncf %47 : vector<64x128xf32> to vector<64x128xbf16>
    %c0_37 = arith.constant 0 : index
    %c0_38 = arith.constant 0 : index
    %c0_39 = arith.constant 0 : index
    %49 = vector.load %arg6[%c0_37, %c0_38, %c0_39] : memref<1x64x128xbf16, #tpu.memory_space<vmem>>, vector<1x64x128xbf16>
    %50 = vector.shape_cast %49 : vector<1x64x128xbf16> to vector<64x128xbf16>
    %51 = vector.shape_cast %48 : vector<64x128xbf16> to vector<1x64x128xbf16>
    tpu.vector_store %arg6[%c0_37, %c0_38, %c0_39], %51 {strides = array<i32>} : memref<1x64x128xbf16, #tpu.memory_space<vmem>>, vector<1x64x128xbf16>,
    return
  }
  func.func @transform_0(%arg0: i32) -> (i32, i32, i32) {
    %c0_i32 = arith.constant 0 : i32
    %c0_i32_0 = arith.constant 0 : i32
    %c0_i32_1 = arith.constant 0 : i32
    return %arg0, %c0_i32, %c0_i32_0 : i32, i32, i32
  }
  func.func @transform_1(%arg0: i32) -> (i32, i32) {
    %c0_i32 = arith.constant 0 : i32
    %c0_i32_0 = arith.constant 0 : i32
    %c0_i32_1 = arith.constant 0 : i32
    return %c0_i32, %c0_i32_0 : i32, i32
  }
  func.func @transform_2(%arg0: i32) -> (i32, i32) {
    %c0_i32 = arith.constant 0 : i32
    %c0_i32_0 = arith.constant 0 : i32
    %c0_i32_1 = arith.constant 0 : i32
    return %c0_i32, %c0_i32_0 : i32, i32
  }
  func.func @transform_3(%arg0: i32) -> (i32, i32) {
    %c0_i32 = arith.constant 0 : i32
    %c0_i32_0 = arith.constant 0 : i32
    %c0_i32_1 = arith.constant 0 : i32
    return %c0_i32, %c0_i32_0 : i32, i32
  }
  func.func @transform_4(%arg0: i32) -> (i32, i32, i32) {
    %c0_i32 = arith.constant 0 : i32
    %c0_i32_0 = arith.constant 0 : i32
    %c0_i32_1 = arith.constant 0 : i32
    %c0_i32_2 = arith.constant 0 : i32
    return %c0_i32, %c0_i32_0, %c0_i32_1 : i32, i32, i32
  }
  func.func @transform_5(%arg0: i32) -> (i32, i32, i32) {
    %c0_i32 = arith.constant 0 : i32
    %c0_i32_0 = arith.constant 0 : i32
    %c0_i32_1 = arith.constant 0 : i32
    return %arg0, %c0_i32, %c0_i32_0 : i32, i32, i32
  }
}

</mosaic_0001>

<llo_original>
// kernel: tpu_custom_call.1
$region0: #{tpu_custom_call.1}
  #allocation0 [shape = 'u32[]', space=smem, size = 0x4, offset = 0x4, fixed_abs, tag = 'smem constant byte address 0x4 - core index']
  #allocation1 [shape = 'u32[144,128]{1,0:T(1,128)}', space=vmem, size = 0x12000, scoped, tag = 'internal scratch']
  %s0 = inlined_call_operand.vmem [shape: bf16[2,256,27], index: 0, kind: input, shape index: {}]
  %s1 = inlined_call_operand.vmem [shape: bf16[27,128], index: 1, kind: input, shape index: {}]
  %s2 = inlined_call_operand.vmem [shape: f32[1,128], index: 2, kind: input, shape index: {}]
  %s3 = inlined_call_operand.vmem [shape: f32[1,128], index: 3, kind: input, shape index: {}]
  %s4 = inlined_call_operand.hbm [shape: bf16[9,64,256], index: 4, kind: input, shape index: {}]
  %s5 = inlined_call_operand.hbm [shape: bf16[2,64,128], index: 5, kind: output, shape index: {}]
  %s6 = sld [smem:[#allocation0]]
  $region57: #{tpu_custom_call.1} parent=0
    _
  %s8 = ssub.s32 1, %s6
  %s9 = scalar_select 0, %s8, %s6
  $region1: #{tpu_custom_call.1} parent=0
    #allocation2 [shape = 'u8[294912]{0}', space=vmem, size = 0x48000, scoped, tag = 'input window, operand 4, single buffered']
    #allocation3 [shape = 's32[2]{0}', space=sflag, size = 0x8, scoped, tag = 'scoped memory for tpu_custom_call.1']
    #allocation4 [shape = 's32[2]{0}', space=sflag, size = 0x8, scoped, tag = 'scoped memory for tpu_custom_call.1']
    #allocation5 [shape = 'u8[32768]{0}', space=vmem, size = 0x8000, scoped, tag = 'output window, operand 0']
    %10 = vsyncpa [#allocation3], 0
    %11 = vsyncpa [#allocation4], 0
    %s12 = scalar_lea.sflag [#allocation4], 1
    %13 = vsyncpa %s12, 0
    loop: start=0, step=1, limit=4
    $region2: #{tpu_custom_call.1} parent=1 // loop_pre_header
      _
    $region3: #{tpu_custom_call.1} parent=1 // loop_header
      %s15 = sphi 0, %s19
      %p16 = scmp.ge.s32.totalorder %s15, 4
      %s25 = sphi 0, %s27
      %s28 = sphi 0, %s25
      %s29 = sphi 0, %s28
      %s45 = sphi 0, %s29
      %s49 = sphi 0, %s49
      %s51 = sphi 0, %s49
      %s52 = sphi 0, %s51
      %s66 = sphi 0, %s52
      %s70 = sphi 0, %s70
      %s72 = sphi 0, %s70
      %s73 = sphi 0, %s72
      %s87 = sphi 0, %s73
      %s91 = sphi 0, %s91
      %s93 = sphi 0, %s91
      %s94 = sphi 0, %s93
      %s108 = sphi 0, %s94
      %s112 = sphi 0, %s112
      %s114 = sphi 0, %s112
      %s115 = sphi 0, %s114
      %s129 = sphi 0, %s115
      %s135 = sphi 0, %s137
      %s138 = sphi 0, %s135
      %s139 = sphi 0, %s138
      %s155 = sphi 0, %s139
    $region4: #{tpu_custom_call.1} parent=1 // loop_header_branch
      %18 = sbr.rel (%p16) target = $region8
    $region5: #{tpu_custom_call.1} parent=1 // loop_body
      %s20 = ssub.s32 %s15, 1
      %s21 = ssub.s32 %s15, 2
      %s22 = sadd.s32 %s15, 1
      %s23 = ssub.s32 %s15, %s22
      %p24 = scmp.eq.s32.totalorder %s23, 0
      %s26 = sadd.s32 %s25, 1
      %s27 = scalar_select %p24, %s25, %s26
      %p30 = pneg %p24
      %p31 = scmp.eq.s32.totalorder %s15, 1
      %p32 = por %p30, %p31
      %p33 = scmp.ne.s32.totalorder %s25, %s28
      %p34 = scmp.eq.s32.totalorder %s15, 0
      %p35 = por %p33, %p34
      %p36 = scmp.ne.s32.totalorder %s25, %s28
      %p37 = scmp.eq.s32.totalorder %s20, 1
      %p38 = por %p36, %p37
      %p39 = scmp.ne.s32.totalorder %s28, %s29
      %p40 = scmp.eq.s32.totalorder %s20, 0
      %p41 = por %p39, %p40
      %p42 = scmp.ne.s32.totalorder %s28, %s29
      %p43 = scmp.eq.s32.totalorder %s21, 1
      %p44 = por %p42, %p43
      %p46 = scmp.ne.s32.totalorder %s29, %s45
      %p47 = scmp.eq.s32.totalorder %s21, 0
      %p48 = por %p46, %p47
      %s50 = sadd.s32 %s49, 1
      %p53 = scmp.eq.s32.totalorder %s15, 1
      %p54 = scmp.ne.s32.totalorder %s49, %s51
      %p55 = scmp.eq.s32.totalorder %s15, 0
      %p56 = por %p54, %p55
      %p57 = scmp.ne.s32.totalorder %s49, %s51
      %p58 = scmp.eq.s32.totalorder %s20, 1
      %p59 = por %p57, %p58
      %p60 = scmp.ne.s32.totalorder %s51, %s52
      %p61 = scmp.eq.s32.totalorder %s20, 0
      %p62 = por %p60, %p61
      %p63 = scmp.ne.s32.totalorder %s51, %s52
      %p64 = scmp.eq.s32.totalorder %s21, 1
      %p65 = por %p63, %p64
      %p67 = scmp.ne.s32.totalorder %s52, %s66
      %p68 = scmp.eq.s32.totalorder %s21, 0
      %p69 = por %p67, %p68
      %s71 = sadd.s32 %s70, 1
      %p74 = scmp.eq.s32.totalorder %s15, 1
      %p75 = scmp.ne.s32.totalorder %s70, %s72
      %p76 = scmp.eq.s32.totalorder %s15, 0
      %p77 = por %p75, %p76
      %p78 = scmp.ne.s32.totalorder %s70, %s72
      %p79 = scmp.eq.s32.totalorder %s20, 1
      %p80 = por %p78, %p79
      %p81 = scmp.ne.s32.totalorder %s72, %s73
      %p82 = scmp.eq.s32.totalorder %s20, 0
      %p83 = por %p81, %p82
      %p84 = scmp.ne.s32.totalorder %s72, %s73
      %p85 = scmp.eq.s32.totalorder %s21, 1
      %p86 = por %p84, %p85
      %p88 = scmp.ne.s32.totalorder %s73, %s87
      %p89 = scmp.eq.s32.totalorder %s21, 0
      %p90 = por %p88, %p89
      %s92 = sadd.s32 %s91, 1
      %p95 = scmp.eq.s32.totalorder %s15, 1
      %p96 = scmp.ne.s32.totalorder %s91, %s93
      %p97 = scmp.eq.s32.totalorder %s15, 0
      %p98 = por %p96, %p97
      %p99 = scmp.ne.s32.totalorder %s91, %s93
      %p100 = scmp.eq.s32.totalorder %s20, 1
      %p101 = por %p99, %p100
      %p102 = scmp.ne.s32.totalorder %s93, %s94
      %p103 = scmp.eq.s32.totalorder %s20, 0
      %p104 = por %p102, %p103
      %p105 = scmp.ne.s32.totalorder %s93, %s94
      %p106 = scmp.eq.s32.totalorder %s21, 1
      %p107 = por %p105, %p106
      %p109 = scmp.ne.s32.totalorder %s94, %s108
      %p110 = scmp.eq.s32.totalorder %s21, 0
      %p111 = por %p109, %p110
      %s113 = sadd.s32 %s112, 1
      %p116 = scmp.eq.s32.totalorder %s15, 1
      %p117 = scmp.ne.s32.totalorder %s112, %s114
      %p118 = scmp.eq.s32.totalorder %s15, 0
      %p119 = por %p117, %p118
      %p120 = scmp.ne.s32.totalorder %s112, %s114
      %p121 = scmp.eq.s32.totalorder %s20, 1
      %p122 = por %p120, %p121
      %p123 = scmp.ne.s32.totalorder %s114, %s115
      %p124 = scmp.eq.s32.totalorder %s20, 0
      %p125 = por %p123, %p124
      %p126 = scmp.ne.s32.totalorder %s114, %s115
      %p127 = scmp.eq.s32.totalorder %s21, 1
      %p128 = por %p126, %p127
      %p130 = scmp.ne.s32.totalorder %s115, %s129
      %p131 = scmp.eq.s32.totalorder %s21, 0
      %p132 = por %p130, %p131
      %s133 = ssub.s32 %s15, %s22
      %p134 = scmp.eq.s32.totalorder %s133, 0
      %s136 = sadd.s32 %s135, 1
      %s137 = scalar_select %p134, %s135, %s136
      %p140 = pneg %p134
      %p141 = scmp.eq.s32.totalorder %s15, 1
      %p142 = por %p140, %p141
      %p143 = scmp.ne.s32.totalorder %s135, %s138
      %p144 = scmp.eq.s32.totalorder %s15, 0
      %p145 = por %p143, %p144
      %p146 = scmp.ne.s32.totalorder %s135, %s138
      %p147 = scmp.eq.s32.totalorder %s20, 1
      %p148 = por %p146, %p147
      %p149 = scmp.ne.s32.totalorder %s138, %s139
      %p150 = scmp.eq.s32.totalorder %s20, 0
      %p151 = por %p149, %p150
      %p152 = scmp.ne.s32.totalorder %s138, %s139
      %p153 = scmp.eq.s32.totalorder %s21, 1
      %p154 = por %p152, %p153
      %p156 = scmp.ne.s32.totalorder %s139, %s155
      %p157 = scmp.eq.s32.totalorder %s21, 0
      %p158 = por %p156, %p157
      %p159 = scmp.le.s32.totalorder 1, %s15
      %p160 = scmp.lt.s32.totalorder %s15, 3
      %p161 = pnand %p159, %p160
      %p162 = pneg %p161
      // Predicated region
      $region9: #{tpu_custom_call.1} parent=5 // pred_check
        _
      $region10: #{tpu_custom_call.1} parent=5 // pred_check_branch
        %164 = sbr.rel (%p161) target = $region12
      $region11: #{tpu_custom_call.1} parent=5 // pred_region
        %s165 = ssub.s32 %s15, 1
        // Predicated region
        $region13: #{tpu_custom_call.1} parent=11 // pred_check
          %p166 = pneg %p62
        $region14: #{tpu_custom_call.1} parent=11 // pred_check_branch
          %168 = sbr.rel (%p166) target = $region16
        $region15: #{tpu_custom_call.1} parent=11 // pred_region
          _
        $region16: #{tpu_custom_call.1} parent=11 // pred_fallthru
          _
        // Predicated region
        $region17: #{tpu_custom_call.1} parent=11 // pred_check
          %p169 = pneg %p83
        $region18: #{tpu_custom_call.1} parent=11 // pred_check_branch
          %171 = sbr.rel (%p169) target = $region20
        $region19: #{tpu_custom_call.1} parent=11 // pred_region
          _
        $region20: #{tpu_custom_call.1} parent=11 // pred_fallthru
          _
        // Predicated region
        $region21: #{tpu_custom_call.1} parent=11 // pred_check
          %p172 = pneg %p104
        $region22: #{tpu_custom_call.1} parent=11 // pred_check_branch
          %174 = sbr.rel (%p172) target = $region24
        $region23: #{tpu_custom_call.1} parent=11 // pred_region
          _
        $region24: #{tpu_custom_call.1} parent=11 // pred_fallthru
          _
        // Predicated region
        $region25: #{tpu_custom_call.1} parent=11 // pred_check
          %p175 = pneg %p125
        $region26: #{tpu_custom_call.1} parent=11 // pred_check_branch
          %177 = sbr.rel (%p175) target = $region28
        $region27: #{tpu_custom_call.1} parent=11 // pred_region
          %s179 = ssub.s32 9216, 9216
          %180 = vsyncadd [#allocation3], %s179
          %s181 = sshll.u32 [#allocation2], 4
          %s182 = int_to_ptr.vmem [resolvable:$true] %s181
          %187 = dma.hbm_to_vmem [thread:$0]  %s4, 9216, %s182, [#allocation3], 128, 128, 8
        $region28: #{tpu_custom_call.1} parent=11 // pred_fallthru
          _
      $region12: #{tpu_custom_call.1} parent=5 // pred_fallthru
        _
      %p188 = scmp.lt.s32.totalorder %s15, 2
      // Predicated region
      $region29: #{tpu_custom_call.1} parent=5 // pred_check
        %p189 = pneg %p188
      $region30: #{tpu_custom_call.1} parent=5 // pred_check_branch
        %191 = sbr.rel (%p189) target = $region32
      $region31: #{tpu_custom_call.1} parent=5 // pred_region
        // Predicated region
        $region33: #{tpu_custom_call.1} parent=31 // pred_check
          %p192 = pneg %p35
        $region34: #{tpu_custom_call.1} parent=31 // pred_check_branch
          %194 = sbr.rel (%p192) target = $region36
        $region35: #{tpu_custom_call.1} parent=31 // pred_region
          %p195 = scmp.lt.s32.totalorder %s15, 1
          %s196 = scalar_select %p195, %s15, 1
          %s197 = smul.addr %s196, 32
          %s198 = smul.addr %s197, 4
          %s199 = scalar_lea.vmem %s0, %s198
        $region36: #{tpu_custom_call.1} parent=31 // pred_fallthru
          _
      $region32: #{tpu_custom_call.1} parent=5 // pred_fallthru
        _
      %p200 = scmp.le.s32.totalorder 1, %s15
      %p201 = scmp.lt.s32.totalorder %s15, 3
      %p202 = pnand %p200, %p201
      %p203 = pneg %p202
      // Predicated region
      $region37: #{tpu_custom_call.1} parent=5 // pred_check
        _
      $region38: #{tpu_custom_call.1} parent=5 // pred_check_branch
        %205 = sbr.rel (%p202) target = $region40
      $region39: #{tpu_custom_call.1} parent=5 // pred_region
        %s206 = ssub.s32 %s15, 1
        // Predicated region
        $region41: #{tpu_custom_call.1} parent=39 // pred_check
          %p207 = pneg %p125
        $region42: #{tpu_custom_call.1} parent=39 // pred_check_branch
          %209 = sbr.rel (%p207) target = $region44
        $region43: #{tpu_custom_call.1} parent=39 // pred_region
          %210 = dma.done [#allocation3], 9216
        $region44: #{tpu_custom_call.1} parent=39 // pred_fallthru
          _
        %p211 = scmp.lt.s32.totalorder %s20, 1
        %s212 = scalar_select %p211, %s20, 1
        %s213 = smul.addr %s212, 32
        %s214 = smul.addr %s213, 4
        %s215 = scalar_lea.vmem %s0, %s214
        %p216 = pneg %p41
        %p217 = pneg %p38
        %p218 = pneg %p62
        %p219 = pneg %p59
        %p220 = pneg %p83
        %p221 = pneg %p80
        %p222 = pneg %p104
        %p223 = pneg %p101
        %p224 = pneg %p125
        %p225 = pneg %p122
        %p226 = pneg %p151
        %p227 = pneg %p148
        %s228 = sand.u32 %s138, 1
        %s229 = scalar_lea.sflag [#allocation4], %s228
        %s230 = sand.u32 %s138, 1
        %s231 = smul.addr %s230, 32
        %s232 = scalar_lea.vmem [#allocation5], %s231
        %p233 = scmp.lt.s32.totalorder %s20, 1
        %s234 = scalar_select %p233, %s20, 1
        %s235 = smul.addr %s234, 32
        %s236 = smul.addr %s235, 4
        %s237 = scalar_lea.vmem %s0, %s236
        %v239 = vld [vmem:[%s237] sm:$0xf]
        %v240 = vld [vmem:[%s237 + $0x4] sm:$0xf]
        %v241 = vld [vmem:[%s237 + $0x8] sm:$0xf]
        %v242 = vld [vmem:[%s237 + $0xc] sm:$0xf]
        %v243 = vld [vmem:[%s237 + $0x10] sm:$0xf]
        %v244 = vld [vmem:[%s237 + $0x14] sm:$0xf]
        %v245 = vld [vmem:[%s237 + $0x18] sm:$0xf]
        %v246 = vld [vmem:[%s237 + $0x1c] sm:$0xf]
        %v247 = vld [vmem:[%s237 + $0x20] sm:$0xf]
        %v248 = vld [vmem:[%s237 + $0x24] sm:$0xf]
        %v249 = vld [vmem:[%s237 + $0x28] sm:$0xf]
        %v250 = vld [vmem:[%s237 + $0x2c] sm:$0xf]
        %v251 = vld [vmem:[%s237 + $0x30] sm:$0xf]
        %v252 = vld [vmem:[%s237 + $0x34] sm:$0xf]
        %v253 = vld [vmem:[%s237 + $0x38] sm:$0xf]
        %v254 = vld [vmem:[%s237 + $0x3c] sm:$0xf]
        %v255 = vld [vmem:[%s237 + $0x40] sm:$0xf]
        %v256 = vld [vmem:[%s237 + $0x44] sm:$0xf]
        %v257 = vld [vmem:[%s237 + $0x48] sm:$0xf]
        %v258 = vld [vmem:[%s237 + $0x4c] sm:$0xf]
        %v259 = vld [vmem:[%s237 + $0x50] sm:$0xf]
        %v260 = vld [vmem:[%s237 + $0x54] sm:$0xf]
        %v261 = vld [vmem:[%s237 + $0x58] sm:$0xf]
        %v262 = vld [vmem:[%s237 + $0x5c] sm:$0xf]
        %v263 = vld [vmem:[%s237 + $0x60] sm:$0xf]
        %v264 = vld [vmem:[%s237 + $0x64] sm:$0xf]
        %v265 = vld [vmem:[%s237 + $0x68] sm:$0xf]
        %v266 = vld [vmem:[%s237 + $0x6c] sm:$0xf]
        %v267 = vld [vmem:[%s237 + $0x70] sm:$0xf]
        %v268 = vld [vmem:[%s237 + $0x74] sm:$0xf]
        %v269 = vld [vmem:[%s237 + $0x78] sm:$0xf]
        %v270 = vld [vmem:[%s237 + $0x7c] sm:$0xf]
        %v271 = vld [vmem:[%s1] sm:$0xf]
        %v272 = vld [vmem:[%s1 + $0x4] sm:$0xf]
        %v273 = vld [vmem:[%s1 + $0x8] sm:$0xf]
        %v274 = vld [vmem:[%s1 + $0xc] sm:$0x3]
        %v307 = vunpack.c.l.b16 %v239
        %v308 = vunpack.c.l.b16 %v240
        %v309 = vunpack.c.l.b16 %v241
        %v310 = vunpack.c.l.b16 %v242
        %v311 = vunpack.c.l.b16 %v243
        %v312 = vunpack.c.l.b16 %v244
        %v313 = vunpack.c.l.b16 %v245
        %v314 = vunpack.c.l.b16 %v246
        %v315 = vunpack.c.l.b16 %v247
        %v316 = vunpack.c.l.b16 %v248
        %v317 = vunpack.c.l.b16 %v249
        %v318 = vunpack.c.l.b16 %v250
        %v319 = vunpack.c.l.b16 %v251
        %v320 = vunpack.c.l.b16 %v252
        %v321 = vunpack.c.l.b16 %v253
        %v322 = vunpack.c.l.b16 %v254
        %v323 = vunpack.c.l.b16 %v255
        %v324 = vunpack.c.l.b16 %v256
        %v325 = vunpack.c.l.b16 %v257
        %v326 = vunpack.c.l.b16 %v258
        %v327 = vunpack.c.l.b16 %v259
        %v328 = vunpack.c.l.b16 %v260
        %v329 = vunpack.c.l.b16 %v261
        %v330 = vunpack.c.l.b16 %v262
        %v331 = vunpack.c.l.b16 %v263
        %v332 = vunpack.c.l.b16 %v264
        %v333 = vunpack.c.l.b16 %v265
        %v334 = vunpack.c.l.b16 %v266
        %v335 = vunpack.c.l.b16 %v267
        %v336 = vunpack.c.l.b16 %v268
        %v337 = vunpack.c.l.b16 %v269
        %v338 = vunpack.c.l.b16 %v270
        %v339 = vpack.c.b16 %v308, %v307
        %v340 = vpack.c.b16 %v310, %v309
        %v341 = vpack.c.b16 %v312, %v311
        %v342 = vpack.c.b16 %v314, %v313
        %v343 = vpack.c.b16 %v316, %v315
        %v344 = vpack.c.b16 %v318, %v317
        %v345 = vpack.c.b16 %v320, %v319
        %v346 = vpack.c.b16 %v322, %v321
        %v347 = vpack.c.b16 %v324, %v323
        %v348 = vpack.c.b16 %v326, %v325
        %v349 = vpack.c.b16 %v328, %v327
        %v350 = vpack.c.b16 %v330, %v329
        %v351 = vpack.c.b16 %v332, %v331
        %v352 = vpack.c.b16 %v334, %v333
        %v353 = vpack.c.b16 %v336, %v335
        %v354 = vpack.c.b16 %v338, %v337
        %v359 = vunpack.c.l.b16 %v271
        %v360 = vunpack.c.l.b16 %v272
        %v361 = vunpack.c.l.b16 %v273
        %v362 = vunpack.c.l.b16 %v274
        %v363 = vpack.c.b16 %v360, %v359
        %v364 = vpack.c.b16 %v362, %v361
        %vm366 = vcmask 220160
        %v368 = vsel %vm366, %v339, 0
        %v371 = vsel %vm366, %v340, 0
        %v374 = vsel %vm366, %v341, 0
        %v377 = vsel %vm366, %v342, 0
        %v380 = vsel %vm366, %v343, 0
        %v383 = vsel %vm366, %v344, 0
        %v386 = vsel %vm366, %v345, 0
        %v389 = vsel %vm366, %v346, 0
        %v392 = vsel %vm366, %v347, 0
        %v395 = vsel %vm366, %v348, 0
        %v398 = vsel %vm366, %v349, 0
        %v401 = vsel %vm366, %v350, 0
        %v404 = vsel %vm366, %v351, 0
        %v407 = vsel %vm366, %v352, 0
        %v410 = vsel %vm366, %v353, 0
        %v413 = vsel %vm366, %v354, 0
        %vm415 = vcmask 1044480
        %vm416 = vcmask 1045504
        %v417 = vsel %vm415, 4294967295, 65535
        %v418 = vsel %vm416, %v417, 0
        %v420 = vand.u32 %v364, %v418
        %422 = vmatprep.subr.bf16.mxu0 0
        %423 = vmatpush1.bf16.msra.mxu0 0
        %424 = vmatprep.subr.bf16.mxu0 0
        %425 = vmatpush1.bf16.msra.mxu0 0
        %426 = vmatprep.subr.bf16.mxu0 0
        %427 = vmatpush1.bf16.msra.mxu0 0
        %428 = vmatprep.subr.bf16.mxu0 0
        %429 = vmatpush1.bf16.msra.mxu0 0
        %430 = vmatprep.subr.bf16.mxu0 0
        %431 = vmatpush1.bf16.msra.mxu0 0
        %432 = vmatprep.subr.bf16.mxu0 0
        %433 = vmatpush1.bf16.msra.mxu0 0
        %434 = vmatprep.subr.bf16.mxu0 0
        %435 = vmatpush1.bf16.msra.mxu0 %v420
        %436 = vmatprep.subr.bf16.mxu0 0
        %437 = vmatpush1.bf16.msra.mxu0 %v363
        %438 = vmatprep.subr.bf16.mxu0 0
        %439 = vmatpush2.bf16.msra.mxu0 0
        %440 = vmatprep.subr.bf16.mxu0 0
        %441 = vmatpush2.bf16.msra.mxu0 0
        %442 = vmatprep.subr.bf16.mxu0 0
        %443 = vmatpush2.bf16.msra.mxu0 0
        %444 = vmatprep.subr.bf16.mxu0 0
        %445 = vmatpush2.bf16.msra.mxu0 0
        %446 = vmatprep.subr.bf16.mxu0 0
        %447 = vmatpush2.bf16.msra.mxu0 0
        %448 = vmatprep.subr.bf16.mxu0 0
        %449 = vmatpush2.bf16.msra.mxu0 0
        %450 = vmatprep.subr.bf16.mxu0 0
        %451 = vmatpush2.bf16.msra.mxu0 0
        %452 = vmatprep.subr.bf16.mxu0 0
        %453 = vmatpush2.bf16.msra.mxu0 0
        %454 = vmatprep.mubr.bf16.mxu0 0
        %455 = vmatmul.mubr.bf16.gmra.mxu0 %v368
        %v456 = vpop.f32.mrf.mxu0
        %v457 = vadd.f32 0.0, %v456
        %v458 = vpop.f32.mrf.mxu0
        %v459 = vpop.f32.mrf.mxu0
        %v460 = vadd.f32 0.0, %v459
        %v461 = vpop.f32.mrf.mxu0
        %462 = vmatprep.mubr.bf16.mxu0 0
        %463 = vmatmul.mubr.bf16.gmra.mxu0 %v371
        %v464 = vpop.f32.mrf.mxu0
        %v465 = vadd.f32 0.0, %v464
        %v466 = vpop.f32.mrf.mxu0
        %v467 = vpop.f32.mrf.mxu0
        %v468 = vadd.f32 0.0, %v467
        %v469 = vpop.f32.mrf.mxu0
        %470 = vmatprep.mubr.bf16.mxu0 0
        %471 = vmatmul.mubr.bf16.gmra.mxu0 %v374
        %v472 = vpop.f32.mrf.mxu0
        %v473 = vadd.f32 0.0, %v472
        %v474 = vpop.f32.mrf.mxu0
        %v475 = vpop.f32.mrf.mxu0
        %v476 = vadd.f32 0.0, %v475
        %v477 = vpop.f32.mrf.mxu0
        %478 = vmatprep.mubr.bf16.mxu0 0
        %479 = vmatmul.mubr.bf16.gmra.mxu0 %v377
        %v480 = vpop.f32.mrf.mxu0
        %v481 = vadd.f32 0.0, %v480
        %v482 = vpop.f32.mrf.mxu0
        %v483 = vpop.f32.mrf.mxu0
        %v484 = vadd.f32 0.0, %v483
        %v485 = vpop.f32.mrf.mxu0
        %486 = vmatprep.mubr.bf16.mxu0 0
        %487 = vmatmul.mubr.bf16.gmra.mxu0 %v380
        %v488 = vpop.f32.mrf.mxu0
        %v489 = vadd.f32 0.0, %v488
        %v490 = vpop.f32.mrf.mxu0
        %v491 = vpop.f32.mrf.mxu0
        %v492 = vadd.f32 0.0, %v491
        %v493 = vpop.f32.mrf.mxu0
        %494 = vmatprep.mubr.bf16.mxu0 0
        %495 = vmatmul.mubr.bf16.gmra.mxu0 %v383
        %v496 = vpop.f32.mrf.mxu0
        %v497 = vadd.f32 0.0, %v496
        %v498 = vpop.f32.mrf.mxu0
        %v499 = vpop.f32.mrf.mxu0
        %v500 = vadd.f32 0.0, %v499
        %v501 = vpop.f32.mrf.mxu0
        %502 = vmatprep.mubr.bf16.mxu0 0
        %503 = vmatmul.mubr.bf16.gmra.mxu0 %v386
        %v504 = vpop.f32.mrf.mxu0
        %v505 = vadd.f32 0.0, %v504
        %v506 = vpop.f32.mrf.mxu0
        %v507 = vpop.f32.mrf.mxu0
        %v508 = vadd.f32 0.0, %v507
        %v509 = vpop.f32.mrf.mxu0
        %510 = vmatprep.mubr.bf16.mxu0 0
        %511 = vmatmul.mubr.bf16.gmra.mxu0 %v389
        %v512 = vpop.f32.mrf.mxu0
        %v513 = vadd.f32 0.0, %v512
        %v514 = vpop.f32.mrf.mxu0
        %v515 = vpop.f32.mrf.mxu0
        %v516 = vadd.f32 0.0, %v515
        %v517 = vpop.f32.mrf.mxu0
        %518 = vmatprep.mubr.bf16.mxu0 0
        %519 = vmatmul.mubr.bf16.gmra.mxu0 %v392
        %v520 = vpop.f32.mrf.mxu0
        %v521 = vadd.f32 0.0, %v520
        %v522 = vpop.f32.mrf.mxu0
        %v523 = vpop.f32.mrf.mxu0
        %v524 = vadd.f32 0.0, %v523
        %v525 = vpop.f32.mrf.mxu0
        %526 = vmatprep.mubr.bf16.mxu0 0
        %527 = vmatmul.mubr.bf16.gmra.mxu0 %v395
        %v528 = vpop.f32.mrf.mxu0
        %v529 = vadd.f32 0.0, %v528
        %v530 = vpop.f32.mrf.mxu0
        %v531 = vpop.f32.mrf.mxu0
        %v532 = vadd.f32 0.0, %v531
        %v533 = vpop.f32.mrf.mxu0
        %534 = vmatprep.mubr.bf16.mxu0 0
        %535 = vmatmul.mubr.bf16.gmra.mxu0 %v398
        %v536 = vpop.f32.mrf.mxu0
        %v537 = vadd.f32 0.0, %v536
        %v538 = vpop.f32.mrf.mxu0
        %v539 = vpop.f32.mrf.mxu0
        %v540 = vadd.f32 0.0, %v539
        %v541 = vpop.f32.mrf.mxu0
        %542 = vmatprep.mubr.bf16.mxu0 0
        %543 = vmatmul.mubr.bf16.gmra.mxu0 %v401
        %v544 = vpop.f32.mrf.mxu0
        %v545 = vadd.f32 0.0, %v544
        %v546 = vpop.f32.mrf.mxu0
        %v547 = vpop.f32.mrf.mxu0
        %v548 = vadd.f32 0.0, %v547
        %v549 = vpop.f32.mrf.mxu0
        %550 = vmatprep.mubr.bf16.mxu0 0
        %551 = vmatmul.mubr.bf16.gmra.mxu0 %v404
        %v552 = vpop.f32.mrf.mxu0
        %v553 = vadd.f32 0.0, %v552
        %v554 = vpop.f32.mrf.mxu0
        %v555 = vpop.f32.mrf.mxu0
        %v556 = vadd.f32 0.0, %v555
        %v557 = vpop.f32.mrf.mxu0
        %558 = vmatprep.mubr.bf16.mxu0 0
        %559 = vmatmul.mubr.bf16.gmra.mxu0 %v407
        %v560 = vpop.f32.mrf.mxu0
        %v561 = vadd.f32 0.0, %v560
        %v562 = vpop.f32.mrf.mxu0
        %v563 = vpop.f32.mrf.mxu0
        %v564 = vadd.f32 0.0, %v563
        %v565 = vpop.f32.mrf.mxu0
        %566 = vmatprep.mubr.bf16.mxu0 0
        %567 = vmatmul.mubr.bf16.gmra.mxu0 %v410
        %v568 = vpop.f32.mrf.mxu0
        %v569 = vadd.f32 0.0, %v568
        %v570 = vpop.f32.mrf.mxu0
        %v571 = vpop.f32.mrf.mxu0
        %v572 = vadd.f32 0.0, %v571
        %v573 = vpop.f32.mrf.mxu0
        %574 = vmatprep.mubr.bf16.mxu0 0
        %575 = vmatmul.mubr.bf16.gmra.mxu0 %v413
        %v576 = vpop.f32.mrf.mxu0
        %v577 = vadd.f32 0.0, %v576
        %v578 = vpop.f32.mrf.mxu0
        %v579 = vpop.f32.mrf.mxu0
        %v580 = vadd.f32 0.0, %v579
        %v581 = vpop.f32.mrf.mxu0
        %582 = vdwg.mxu0
        %v583 = vld [vmem:[%s2] sm:$0x1]
        %v585 = vlaneseq
        %v586 = vshrl.u32 %v585, 7
        %v587 = vsub.s32 0, %v586
        %v588 = vrot.slane %v583, %v587
        %v590 = vmul.f32 %v457, %v588
        %v591 = vmul.f32 %v460, %v588
        %v592 = vmul.f32 %v465, %v588
        %v593 = vmul.f32 %v468, %v588
        %v594 = vmul.f32 %v473, %v588
        %v595 = vmul.f32 %v476, %v588
        %v596 = vmul.f32 %v481, %v588
        %v597 = vmul.f32 %v484, %v588
        %v598 = vmul.f32 %v489, %v588
        %v599 = vmul.f32 %v492, %v588
        %v600 = vmul.f32 %v497, %v588
        %v601 = vmul.f32 %v500, %v588
        %v602 = vmul.f32 %v505, %v588
        %v603 = vmul.f32 %v508, %v588
        %v604 = vmul.f32 %v513, %v588
        %v605 = vmul.f32 %v516, %v588
        %v606 = vmul.f32 %v521, %v588
        %v607 = vmul.f32 %v524, %v588
        %v608 = vmul.f32 %v529, %v588
        %v609 = vmul.f32 %v532, %v588
        %v610 = vmul.f32 %v537, %v588
        %v611 = vmul.f32 %v540, %v588
        %v612 = vmul.f32 %v545, %v588
        %v613 = vmul.f32 %v548, %v588
        %v614 = vmul.f32 %v553, %v588
        %v615 = vmul.f32 %v556, %v588
        %v616 = vmul.f32 %v561, %v588
        %v617 = vmul.f32 %v564, %v588
        %v618 = vmul.f32 %v569, %v588
        %v619 = vmul.f32 %v572, %v588
        %v620 = vmul.f32 %v577, %v588
        %v621 = vmul.f32 %v580, %v588
        %v622 = vld [vmem:[%s3] sm:$0x1]
        %v624 = vlaneseq
        %v625 = vshrl.u32 %v624, 7
        %v626 = vsub.s32 0, %v625
        %v627 = vrot.slane %v622, %v626
        %v629 = vadd.f32 %v590, %v627
        %v630 = vadd.f32 %v591, %v627
        %v631 = vadd.f32 %v592, %v627
        %v632 = vadd.f32 %v593, %v627
        %v633 = vadd.f32 %v594, %v627
        %v634 = vadd.f32 %v595, %v627
        %v635 = vadd.f32 %v596, %v627
        %v636 = vadd.f32 %v597, %v627
        %v637 = vadd.f32 %v598, %v627
        %v638 = vadd.f32 %v599, %v627
        %v639 = vadd.f32 %v600, %v627
        %v640 = vadd.f32 %v601, %v627
        %v641 = vadd.f32 %v602, %v627
        %v642 = vadd.f32 %v603, %v627
        %v643 = vadd.f32 %v604, %v627
        %v644 = vadd.f32 %v605, %v627
        %v645 = vadd.f32 %v606, %v627
        %v646 = vadd.f32 %v607, %v627
        %v647 = vadd.f32 %v608, %v627
        %v648 = vadd.f32 %v609, %v627
        %v649 = vadd.f32 %v610, %v627
        %v650 = vadd.f32 %v611, %v627
        %v651 = vadd.f32 %v612, %v627
        %v652 = vadd.f32 %v613, %v627
        %v653 = vadd.f32 %v614, %v627
        %v654 = vadd.f32 %v615, %v627
        %v655 = vadd.f32 %v616, %v627
        %v656 = vadd.f32 %v617, %v627
        %v657 = vadd.f32 %v618, %v627
        %v658 = vadd.f32 %v619, %v627
        %v659 = vadd.f32 %v620, %v627
        %v660 = vadd.f32 %v621, %v627
        %v661 = vmax.f32 %v629, 0.0
        %v662 = vmax.f32 %v630, 0.0
        %v663 = vmax.f32 %v631, 0.0
        %v664 = vmax.f32 %v632, 0.0
        %v665 = vmax.f32 %v633, 0.0
        %v666 = vmax.f32 %v634, 0.0
        %v667 = vmax.f32 %v635, 0.0
        %v668 = vmax.f32 %v636, 0.0
        %v669 = vmax.f32 %v637, 0.0
        %v670 = vmax.f32 %v638, 0.0
        %v671 = vmax.f32 %v639, 0.0
        %v672 = vmax.f32 %v640, 0.0
        %v673 = vmax.f32 %v641, 0.0
        %v674 = vmax.f32 %v642, 0.0
        %v675 = vmax.f32 %v643, 0.0
        %v676 = vmax.f32 %v644, 0.0
        %v677 = vmax.f32 %v645, 0.0
        %v678 = vmax.f32 %v646, 0.0
        %v679 = vmax.f32 %v647, 0.0
        %v680 = vmax.f32 %v648, 0.0
        %v681 = vmax.f32 %v649, 0.0
        %v682 = vmax.f32 %v650, 0.0
        %v683 = vmax.f32 %v651, 0.0
        %v684 = vmax.f32 %v652, 0.0
        %v685 = vmax.f32 %v653, 0.0
        %v686 = vmax.f32 %v654, 0.0
        %v687 = vmax.f32 %v655, 0.0
        %v688 = vmax.f32 %v656, 0.0
        %v689 = vmax.f32 %v657, 0.0
        %v690 = vmax.f32 %v658, 0.0
        %v691 = vmax.f32 %v659, 0.0
        %v692 = vmax.f32 %v660, 0.0
        %v693 = vpack.c.bf16 %v662, %v661
        %v694 = vpack.c.bf16 %v664, %v663
        %v695 = vpack.c.bf16 %v666, %v665
        %v696 = vpack.c.bf16 %v668, %v667
        %v697 = vpack.c.bf16 %v670, %v669
        %v698 = vpack.c.bf16 %v672, %v671
        %v699 = vpack.c.bf16 %v674, %v673
        %v700 = vpack.c.bf16 %v676, %v675
        %v701 = vpack.c.bf16 %v678, %v677
        %v702 = vpack.c.bf16 %v680, %v679
        %v703 = vpack.c.bf16 %v682, %v681
        %v704 = vpack.c.bf16 %v684, %v683
        %v705 = vpack.c.bf16 %v686, %v685
        %v706 = vpack.c.bf16 %v688, %v687
        %v707 = vpack.c.bf16 %v690, %v689
        %v708 = vpack.c.bf16 %v692, %v691
        %v709 = vld [vmem:[#allocation2] sm:$0xff]
        %v710 = vld [vmem:[#allocation2 + $0x8] sm:$0xff]
        %v711 = vld [vmem:[#allocation2 + $0x10] sm:$0xff]
        %v712 = vld [vmem:[#allocation2 + $0x18] sm:$0xff]
        %v713 = vld [vmem:[#allocation2 + $0x20] sm:$0xff]
        %v714 = vld [vmem:[#allocation2 + $0x28] sm:$0xff]
        %v715 = vld [vmem:[#allocation2 + $0x30] sm:$0xff]
        %v716 = vld [vmem:[#allocation2 + $0x38] sm:$0xff]
        %v725 = vunpack.c.l.b16 %v709
        %v726 = vunpack.c.h.b16 %v709
        %v727 = vunpack.c.l.b16 %v710
        %v728 = vunpack.c.h.b16 %v710
        %v729 = vunpack.c.l.b16 %v711
        %v730 = vunpack.c.h.b16 %v711
        %v731 = vunpack.c.l.b16 %v712
        %v732 = vunpack.c.h.b16 %v712
        %v733 = vunpack.c.l.b16 %v713
        %v734 = vunpack.c.h.b16 %v713
        %v735 = vunpack.c.l.b16 %v714
        %v736 = vunpack.c.h.b16 %v714
        %v737 = vunpack.c.l.b16 %v715
        %v738 = vunpack.c.h.b16 %v715
        %v739 = vunpack.c.l.b16 %v716
        %v740 = vunpack.c.h.b16 %v716
        %v741 = vpack.c.b16 %v727, %v725
        %v742 = vpack.c.b16 %v728, %v726
        %v743 = vpack.c.b16 %v731, %v729
        %v744 = vpack.c.b16 %v732, %v730
        %v745 = vpack.c.b16 %v735, %v733
        %v746 = vpack.c.b16 %v736, %v734
        %v747 = vpack.c.b16 %v739, %v737
        %v748 = vpack.c.b16 %v740, %v738
        %757 = vmatprep.subr.bf16.mxu0 0
        %758 = vmatpush1.bf16.msra.mxu0 %v700
        %759 = vmatprep.subr.bf16.mxu0 0
        %760 = vmatpush1.bf16.msra.mxu0 %v699
        %761 = vmatprep.subr.bf16.mxu0 0
        %762 = vmatpush1.bf16.msra.mxu0 %v698
        %763 = vmatprep.subr.bf16.mxu0 0
        %764 = vmatpush1.bf16.msra.mxu0 %v697
        %765 = vmatprep.subr.bf16.mxu0 0
        %766 = vmatpush1.bf16.msra.mxu0 %v696
        %767 = vmatprep.subr.bf16.mxu0 0
        %768 = vmatpush1.bf16.msra.mxu0 %v695
        %769 = vmatprep.subr.bf16.mxu0 0
        %770 = vmatpush1.bf16.msra.mxu0 %v694
        %771 = vmatprep.subr.bf16.mxu0 0
        %772 = vmatpush1.bf16.msra.mxu0 %v693
        %773 = vmatprep.subr.bf16.mxu0 0
        %774 = vmatpush2.bf16.msra.mxu0 %v708
        %775 = vmatprep.subr.bf16.mxu0 0
        %776 = vmatpush2.bf16.msra.mxu0 %v707
        %777 = vmatprep.subr.bf16.mxu0 0
        %778 = vmatpush2.bf16.msra.mxu0 %v706
        %779 = vmatprep.subr.bf16.mxu0 0
        %780 = vmatpush2.bf16.msra.mxu0 %v705
        %781 = vmatprep.subr.bf16.mxu0 0
        %782 = vmatpush2.bf16.msra.mxu0 %v704
        %783 = vmatprep.subr.bf16.mxu0 0
        %784 = vmatpush2.bf16.msra.mxu0 %v703
        %785 = vmatprep.subr.bf16.mxu0 0
        %786 = vmatpush2.bf16.msra.mxu0 %v702
        %787 = vmatprep.subr.bf16.mxu0 0
        %788 = vmatpush2.bf16.msra.mxu0 %v701
        %789 = vmatprep.mubr.bf16.mxu0 %v742
        %790 = vmatmul.mubr.bf16.gmra.mxu0 %v741
        %v791 = vpop.f32.mrf.mxu0
        %v792 = vadd.f32 0.0, %v791
        %v793 = vpop.f32.mrf.mxu0
        %v794 = vpop.f32.mrf.mxu0
        %v795 = vadd.f32 0.0, %v794
        %v796 = vpop.f32.mrf.mxu0
        %797 = vmatprep.mubr.bf16.mxu0 %v744
        %798 = vmatmul.mubr.bf16.gmra.mxu0 %v743
        %v799 = vpop.f32.mrf.mxu0
        %v800 = vadd.f32 0.0, %v799
        %v801 = vpop.f32.mrf.mxu0
        %v802 = vpop.f32.mrf.mxu0
        %v803 = vadd.f32 0.0, %v802
        %v804 = vpop.f32.mrf.mxu0
        %805 = vmatprep.mubr.bf16.mxu0 %v746
        %806 = vmatmul.mubr.bf16.gmra.mxu0 %v745
        %v807 = vpop.f32.mrf.mxu0
        %v808 = vadd.f32 0.0, %v807
        %v809 = vpop.f32.mrf.mxu0
        %v810 = vpop.f32.mrf.mxu0
        %v811 = vadd.f32 0.0, %v810
        %v812 = vpop.f32.mrf.mxu0
        %813 = vmatprep.mubr.bf16.mxu0 %v748
        %814 = vmatmul.mubr.bf16.gmra.mxu0 %v747
        %v815 = vpop.f32.mrf.mxu0
        %v816 = vadd.f32 0.0, %v815
        %v817 = vpop.f32.mrf.mxu0
        %v818 = vpop.f32.mrf.mxu0
        %v819 = vadd.f32 0.0, %v818
        %v820 = vpop.f32.mrf.mxu0
        %821 = vdwg.mxu0
        %s822 = scalar_lea.vmem [#allocation2], 64
        %v823 = vld [vmem:[%s822] sm:$0xff]
        %v824 = vld [vmem:[%s822 + $0x8] sm:$0xff]
        %v825 = vld [vmem:[%s822 + $0x10] sm:$0xff]
        %v826 = vld [vmem:[%s822 + $0x18] sm:$0xff]
        %v827 = vld [vmem:[%s822 + $0x20] sm:$0xff]
        %v828 = vld [vmem:[%s822 + $0x28] sm:$0xff]
        %v829 = vld [vmem:[%s822 + $0x30] sm:$0xff]
        %v830 = vld [vmem:[%s822 + $0x38] sm:$0xff]
        %v839 = vunpack.c.l.b16 %v823
        %v840 = vunpack.c.h.b16 %v823
        %v841 = vunpack.c.l.b16 %v824
        %v842 = vunpack.c.h.b16 %v824
        %v843 = vunpack.c.l.b16 %v825
        %v844 = vunpack.c.h.b16 %v825
        %v845 = vunpack.c.l.b16 %v826
        %v846 = vunpack.c.h.b16 %v826
        %v847 = vunpack.c.l.b16 %v827
        %v848 = vunpack.c.h.b16 %v827
        %v849 = vunpack.c.l.b16 %v828
        %v850 = vunpack.c.h.b16 %v828
        %v851 = vunpack.c.l.b16 %v829
        %v852 = vunpack.c.h.b16 %v829
        %v853 = vunpack.c.l.b16 %v830
        %v854 = vunpack.c.h.b16 %v830
        %v855 = vpack.c.b16 %v841, %v839
        %v856 = vpack.c.b16 %v842, %v840
        %v857 = vpack.c.b16 %v845, %v843
        %v858 = vpack.c.b16 %v846, %v844
        %v859 = vpack.c.b16 %v849, %v847
        %v860 = vpack.c.b16 %v850, %v848
        %v861 = vpack.c.b16 %v853, %v851
        %v862 = vpack.c.b16 %v854, %v852
        %871 = vmatprep.subr.bf16.mxu0 0
        %872 = vmatpush1.bf16.msra.mxu0 %v700
        %873 = vmatprep.subr.bf16.mxu0 0
        %874 = vmatpush1.bf16.msra.mxu0 %v699
        %875 = vmatprep.subr.bf16.mxu0 0
        %876 = vmatpush1.bf16.msra.mxu0 %v698
        %877 = vmatprep.subr.bf16.mxu0 0
        %878 = vmatpush1.bf16.msra.mxu0 %v697
        %879 = vmatprep.subr.bf16.mxu0 0
        %880 = vmatpush1.bf16.msra.mxu0 %v696
        %881 = vmatprep.subr.bf16.mxu0 0
        %882 = vmatpush1.bf16.msra.mxu0 %v695
        %883 = vmatprep.subr.bf16.mxu0 0
        %884 = vmatpush1.bf16.msra.mxu0 %v694
        %885 = vmatprep.subr.bf16.mxu0 0
        %886 = vmatpush1.bf16.msra.mxu0 %v693
        %887 = vmatprep.subr.bf16.mxu0 0
        %888 = vmatpush2.bf16.msra.mxu0 %v708
        %889 = vmatprep.subr.bf16.mxu0 0
        %890 = vmatpush2.bf16.msra.mxu0 %v707
        %891 = vmatprep.subr.bf16.mxu0 0
        %892 = vmatpush2.bf16.msra.mxu0 %v706
        %893 = vmatprep.subr.bf16.mxu0 0
        %894 = vmatpush2.bf16.msra.mxu0 %v705
        %895 = vmatprep.subr.bf16.mxu0 0
        %896 = vmatpush2.bf16.msra.mxu0 %v704
        %897 = vmatprep.subr.bf16.mxu0 0
        %898 = vmatpush2.bf16.msra.mxu0 %v703
        %899 = vmatprep.subr.bf16.mxu0 0
        %900 = vmatpush2.bf16.msra.mxu0 %v702
        %901 = vmatprep.subr.bf16.mxu0 0
        %902 = vmatpush2.bf16.msra.mxu0 %v701
        %903 = vmatprep.mubr.bf16.mxu0 %v856
        %904 = vmatmul.mubr.bf16.gmra.mxu0 %v855
        %v905 = vpop.f32.mrf.mxu0
        %v906 = vadd.f32 0.0, %v905
        %v907 = vpop.f32.mrf.mxu0
        %v908 = vpop.f32.mrf.mxu0
        %v909 = vadd.f32 0.0, %v908
        %v910 = vpop.f32.mrf.mxu0
        %911 = vmatprep.mubr.bf16.mxu0 %v858
        %912 = vmatmul.mubr.bf16.gmra.mxu0 %v857
        %v913 = vpop.f32.mrf.mxu0
        %v914 = vadd.f32 0.0, %v913
        %v915 = vpop.f32.mrf.mxu0
        %v916 = vpop.f32.mrf.mxu0
        %v917 = vadd.f32 0.0, %v916
        %v918 = vpop.f32.mrf.mxu0
        %919 = vmatprep.mubr.bf16.mxu0 %v860
        %920 = vmatmul.mubr.bf16.gmra.mxu0 %v859
        %v921 = vpop.f32.mrf.mxu0
        %v922 = vadd.f32 0.0, %v921
        %v923 = vpop.f32.mrf.mxu0
        %v924 = vpop.f32.mrf.mxu0
        %v925 = vadd.f32 0.0, %v924
        %v926 = vpop.f32.mrf.mxu0
        %927 = vmatprep.mubr.bf16.mxu0 %v862
        %928 = vmatmul.mubr.bf16.gmra.mxu0 %v861
        %v929 = vpop.f32.mrf.mxu0
        %v930 = vadd.f32 0.0, %v929
        %v931 = vpop.f32.mrf.mxu0
        %v932 = vpop.f32.mrf.mxu0
        %v933 = vadd.f32 0.0, %v932
        %v934 = vpop.f32.mrf.mxu0
        %935 = vdwg.mxu0
        %v936 = vmax.f32 %v792, %v906
        %v937 = vmax.f32 %v795, %v909
        %v938 = vmax.f32 %v800, %v914
        %v939 = vmax.f32 %v803, %v917
        %v940 = vmax.f32 %v808, %v922
        %v941 = vmax.f32 %v811, %v925
        %v942 = vmax.f32 %v816, %v930
        %v943 = vmax.f32 %v819, %v933
        %s944 = scalar_lea.vmem [#allocation2], 128
        %v945 = vld [vmem:[%s944] sm:$0xff]
        %v946 = vld [vmem:[%s944 + $0x8] sm:$0xff]
        %v947 = vld [vmem:[%s944 + $0x10] sm:$0xff]
        %v948 = vld [vmem:[%s944 + $0x18] sm:$0xff]
        %v949 = vld [vmem:[%s944 + $0x20] sm:$0xff]
        %v950 = vld [vmem:[%s944 + $0x28] sm:$0xff]
        %v951 = vld [vmem:[%s944 + $0x30] sm:$0xff]
        %v952 = vld [vmem:[%s944 + $0x38] sm:$0xff]
        %v961 = vunpack.c.l.b16 %v945
        %v962 = vunpack.c.h.b16 %v945
        %v963 = vunpack.c.l.b16 %v946
        %v964 = vunpack.c.h.b16 %v946
        %v965 = vunpack.c.l.b16 %v947
        %v966 = vunpack.c.h.b16 %v947
        %v967 = vunpack.c.l.b16 %v948
        %v968 = vunpack.c.h.b16 %v948
        %v969 = vunpack.c.l.b16 %v949
        %v970 = vunpack.c.h.b16 %v949
        %v971 = vunpack.c.l.b16 %v950
        %v972 = vunpack.c.h.b16 %v950
        %v973 = vunpack.c.l.b16 %v951
        %v974 = vunpack.c.h.b16 %v951
        %v975 = vunpack.c.l.b16 %v952
        %v976 = vunpack.c.h.b16 %v952
        %v977 = vpack.c.b16 %v963, %v961
        %v978 = vpack.c.b16 %v964, %v962
        %v979 = vpack.c.b16 %v967, %v965
        %v980 = vpack.c.b16 %v968, %v966
        %v981 = vpack.c.b16 %v971, %v969
        %v982 = vpack.c.b16 %v972, %v970
        %v983 = vpack.c.b16 %v975, %v973
        %v984 = vpack.c.b16 %v976, %v974
        %993 = vmatprep.subr.bf16.mxu0 0
        %994 = vmatpush1.bf16.msra.mxu0 %v700
        %995 = vmatprep.subr.bf16.mxu0 0
        %996 = vmatpush1.bf16.msra.mxu0 %v699
        %997 = vmatprep.subr.bf16.mxu0 0
        %998 = vmatpush1.bf16.msra.mxu0 %v698
        %999 = vmatprep.subr.bf16.mxu0 0
        %1000 = vmatpush1.bf16.msra.mxu0 %v697
        %1001 = vmatprep.subr.bf16.mxu0 0
        %1002 = vmatpush1.bf16.msra.mxu0 %v696
        %1003 = vmatprep.subr.bf16.mxu0 0
        %1004 = vmatpush1.bf16.msra.mxu0 %v695
        %1005 = vmatprep.subr.bf16.mxu0 0
        %1006 = vmatpush1.bf16.msra.mxu0 %v694
        %1007 = vmatprep.subr.bf16.mxu0 0
        %1008 = vmatpush1.bf16.msra.mxu0 %v693
        %1009 = vmatprep.subr.bf16.mxu0 0
        %1010 = vmatpush2.bf16.msra.mxu0 %v708
        %1011 = vmatprep.subr.bf16.mxu0 0
        %1012 = vmatpush2.bf16.msra.mxu0 %v707
        %1013 = vmatprep.subr.bf16.mxu0 0
        %1014 = vmatpush2.bf16.msra.mxu0 %v706
        %1015 = vmatprep.subr.bf16.mxu0 0
        %1016 = vmatpush2.bf16.msra.mxu0 %v705
        %1017 = vmatprep.subr.bf16.mxu0 0
        %1018 = vmatpush2.bf16.msra.mxu0 %v704
        %1019 = vmatprep.subr.bf16.mxu0 0
        %1020 = vmatpush2.bf16.msra.mxu0 %v703
        %1021 = vmatprep.subr.bf16.mxu0 0
        %1022 = vmatpush2.bf16.msra.mxu0 %v702
        %1023 = vmatprep.subr.bf16.mxu0 0
        %1024 = vmatpush2.bf16.msra.mxu0 %v701
        %1025 = vmatprep.mubr.bf16.mxu0 %v978
        %1026 = vmatmul.mubr.bf16.gmra.mxu0 %v977
        %v1027 = vpop.f32.mrf.mxu0
        %v1028 = vadd.f32 0.0, %v1027
        %v1029 = vpop.f32.mrf.mxu0
        %v1030 = vpop.f32.mrf.mxu0
        %v1031 = vadd.f32 0.0, %v1030
        %v1032 = vpop.f32.mrf.mxu0
        %1033 = vmatprep.mubr.bf16.mxu0 %v980
        %1034 = vmatmul.mubr.bf16.gmra.mxu0 %v979
        %v1035 = vpop.f32.mrf.mxu0
        %v1036 = vadd.f32 0.0, %v1035
        %v1037 = vpop.f32.mrf.mxu0
        %v1038 = vpop.f32.mrf.mxu0
        %v1039 = vadd.f32 0.0, %v1038
        %v1040 = vpop.f32.mrf.mxu0
        %1041 = vmatprep.mubr.bf16.mxu0 %v982
        %1042 = vmatmul.mubr.bf16.gmra.mxu0 %v981
        %v1043 = vpop.f32.mrf.mxu0
        %v1044 = vadd.f32 0.0, %v1043
        %v1045 = vpop.f32.mrf.mxu0
        %v1046 = vpop.f32.mrf.mxu0
        %v1047 = vadd.f32 0.0, %v1046
        %v1048 = vpop.f32.mrf.mxu0
        %1049 = vmatprep.mubr.bf16.mxu0 %v984
        %1050 = vmatmul.mubr.bf16.gmra.mxu0 %v983
        %v1051 = vpop.f32.mrf.mxu0
        %v1052 = vadd.f32 0.0, %v1051
        %v1053 = vpop.f32.mrf.mxu0
        %v1054 = vpop.f32.mrf.mxu0
        %v1055 = vadd.f32 0.0, %v1054
        %v1056 = vpop.f32.mrf.mxu0
        %1057 = vdwg.mxu0
        %v1058 = vmax.f32 %v936, %v1028
        %v1059 = vmax.f32 %v937, %v1031
        %v1060 = vmax.f32 %v938, %v1036
        %v1061 = vmax.f32 %v939, %v1039
        %v1062 = vmax.f32 %v940, %v1044
        %v1063 = vmax.f32 %v941, %v1047
        %v1064 = vmax.f32 %v942, %v1052
        %v1065 = vmax.f32 %v943, %v1055
        %s1066 = scalar_lea.vmem [#allocation2], 192
        %v1067 = vld [vmem:[%s1066] sm:$0xff]
        %v1068 = vld [vmem:[%s1066 + $0x8] sm:$0xff]
        %v1069 = vld [vmem:[%s1066 + $0x10] sm:$0xff]
        %v1070 = vld [vmem:[%s1066 + $0x18] sm:$0xff]
        %v1071 = vld [vmem:[%s1066 + $0x20] sm:$0xff]
        %v1072 = vld [vmem:[%s1066 + $0x28] sm:$0xff]
        %v1073 = vld [vmem:[%s1066 + $0x30] sm:$0xff]
        %v1074 = vld [vmem:[%s1066 + $0x38] sm:$0xff]
        %v1083 = vunpack.c.l.b16 %v1067
        %v1084 = vunpack.c.h.b16 %v1067
        %v1085 = vunpack.c.l.b16 %v1068
        %v1086 = vunpack.c.h.b16 %v1068
        %v1087 = vunpack.c.l.b16 %v1069
        %v1088 = vunpack.c.h.b16 %v1069
        %v1089 = vunpack.c.l.b16 %v1070
        %v1090 = vunpack.c.h.b16 %v1070
        %v1091 = vunpack.c.l.b16 %v1071
        %v1092 = vunpack.c.h.b16 %v1071
        %v1093 = vunpack.c.l.b16 %v1072
        %v1094 = vunpack.c.h.b16 %v1072
        %v1095 = vunpack.c.l.b16 %v1073
        %v1096 = vunpack.c.h.b16 %v1073
        %v1097 = vunpack.c.l.b16 %v1074
        %v1098 = vunpack.c.h.b16 %v1074
        %v1099 = vpack.c.b16 %v1085, %v1083
        %v1100 = vpack.c.b16 %v1086, %v1084
        %v1101 = vpack.c.b16 %v1089, %v1087
        %v1102 = vpack.c.b16 %v1090, %v1088
        %v1103 = vpack.c.b16 %v1093, %v1091
        %v1104 = vpack.c.b16 %v1094, %v1092
        %v1105 = vpack.c.b16 %v1097, %v1095
        %v1106 = vpack.c.b16 %v1098, %v1096
        %1115 = vmatprep.subr.bf16.mxu0 0
        %1116 = vmatpush1.bf16.msra.mxu0 %v700
        %1117 = vmatprep.subr.bf16.mxu0 0
        %1118 = vmatpush1.bf16.msra.mxu0 %v699
        %1119 = vmatprep.subr.bf16.mxu0 0
        %1120 = vmatpush1.bf16.msra.mxu0 %v698
        %1121 = vmatprep.subr.bf16.mxu0 0
        %1122 = vmatpush1.bf16.msra.mxu0 %v697
        %1123 = vmatprep.subr.bf16.mxu0 0
        %1124 = vmatpush1.bf16.msra.mxu0 %v696
        %1125 = vmatprep.subr.bf16.mxu0 0
        %1126 = vmatpush1.bf16.msra.mxu0 %v695
        %1127 = vmatprep.subr.bf16.mxu0 0
        %1128 = vmatpush1.bf16.msra.mxu0 %v694
        %1129 = vmatprep.subr.bf16.mxu0 0
        %1130 = vmatpush1.bf16.msra.mxu0 %v693
        %1131 = vmatprep.subr.bf16.mxu0 0
        %1132 = vmatpush2.bf16.msra.mxu0 %v708
        %1133 = vmatprep.subr.bf16.mxu0 0
        %1134 = vmatpush2.bf16.msra.mxu0 %v707
        %1135 = vmatprep.subr.bf16.mxu0 0
        %1136 = vmatpush2.bf16.msra.mxu0 %v706
        %1137 = vmatprep.subr.bf16.mxu0 0
        %1138 = vmatpush2.bf16.msra.mxu0 %v705
        %1139 = vmatprep.subr.bf16.mxu0 0
        %1140 = vmatpush2.bf16.msra.mxu0 %v704
        %1141 = vmatprep.subr.bf16.mxu0 0
        %1142 = vmatpush2.bf16.msra.mxu0 %v703
        %1143 = vmatprep.subr.bf16.mxu0 0
        %1144 = vmatpush2.bf16.msra.mxu0 %v702
        %1145 = vmatprep.subr.bf16.mxu0 0
        %1146 = vmatpush2.bf16.msra.mxu0 %v701
        %1147 = vmatprep.mubr.bf16.mxu0 %v1100
        %1148 = vmatmul.mubr.bf16.gmra.mxu0 %v1099
        %v1149 = vpop.f32.mrf.mxu0
        %v1150 = vadd.f32 0.0, %v1149
        %v1151 = vpop.f32.mrf.mxu0
        %v1152 = vpop.f32.mrf.mxu0
        %v1153 = vadd.f32 0.0, %v1152
        %v1154 = vpop.f32.mrf.mxu0
        %1155 = vmatprep.mubr.bf16.mxu0 %v1102
        %1156 = vmatmul.mubr.bf16.gmra.mxu0 %v1101
        %v1157 = vpop.f32.mrf.mxu0
        %v1158 = vadd.f32 0.0, %v1157
        %v1159 = vpop.f32.mrf.mxu0
        %v1160 = vpop.f32.mrf.mxu0
        %v1161 = vadd.f32 0.0, %v1160
        %v1162 = vpop.f32.mrf.mxu0
        %1163 = vmatprep.mubr.bf16.mxu0 %v1104
        %1164 = vmatmul.mubr.bf16.gmra.mxu0 %v1103
        %v1165 = vpop.f32.mrf.mxu0
        %v1166 = vadd.f32 0.0, %v1165
        %v1167 = vpop.f32.mrf.mxu0
        %v1168 = vpop.f32.mrf.mxu0
        %v1169 = vadd.f32 0.0, %v1168
        %v1170 = vpop.f32.mrf.mxu0
        %1171 = vmatprep.mubr.bf16.mxu0 %v1106
        %1172 = vmatmul.mubr.bf16.gmra.mxu0 %v1105
        %v1173 = vpop.f32.mrf.mxu0
        %v1174 = vadd.f32 0.0, %v1173
        %v1175 = vpop.f32.mrf.mxu0
        %v1176 = vpop.f32.mrf.mxu0
        %v1177 = vadd.f32 0.0, %v1176
        %v1178 = vpop.f32.mrf.mxu0
        %1179 = vdwg.mxu0
        %v1180 = vmax.f32 %v1058, %v1150
        %v1181 = vmax.f32 %v1059, %v1153
        %v1182 = vmax.f32 %v1060, %v1158
        %v1183 = vmax.f32 %v1061, %v1161
        %v1184 = vmax.f32 %v1062, %v1166
        %v1185 = vmax.f32 %v1063, %v1169
        %v1186 = vmax.f32 %v1064, %v1174
        %v1187 = vmax.f32 %v1065, %v1177
        %s1188 = scalar_lea.vmem [#allocation2], 256
        %v1189 = vld [vmem:[%s1188] sm:$0xff]
        %v1190 = vld [vmem:[%s1188 + $0x8] sm:$0xff]
        %v1191 = vld [vmem:[%s1188 + $0x10] sm:$0xff]
        %v1192 = vld [vmem:[%s1188 + $0x18] sm:$0xff]
        %v1193 = vld [vmem:[%s1188 + $0x20] sm:$0xff]
        %v1194 = vld [vmem:[%s1188 + $0x28] sm:$0xff]
        %v1195 = vld [vmem:[%s1188 + $0x30] sm:$0xff]
        %v1196 = vld [vmem:[%s1188 + $0x38] sm:$0xff]
        %v1205 = vunpack.c.l.b16 %v1189
        %v1206 = vunpack.c.h.b16 %v1189
        %v1207 = vunpack.c.l.b16 %v1190
        %v1208 = vunpack.c.h.b16 %v1190
        %v1209 = vunpack.c.l.b16 %v1191
        %v1210 = vunpack.c.h.b16 %v1191
        %v1211 = vunpack.c.l.b16 %v1192
        %v1212 = vunpack.c.h.b16 %v1192
        %v1213 = vunpack.c.l.b16 %v1193
        %v1214 = vunpack.c.h.b16 %v1193
        %v1215 = vunpack.c.l.b16 %v1194
        %v1216 = vunpack.c.h.b16 %v1194
        %v1217 = vunpack.c.l.b16 %v1195
        %v1218 = vunpack.c.h.b16 %v1195
        %v1219 = vunpack.c.l.b16 %v1196
        %v1220 = vunpack.c.h.b16 %v1196
        %v1221 = vpack.c.b16 %v1207, %v1205
        %v1222 = vpack.c.b16 %v1208, %v1206
        %v1223 = vpack.c.b16 %v1211, %v1209
        %v1224 = vpack.c.b16 %v1212, %v1210
        %v1225 = vpack.c.b16 %v1215, %v1213
        %v1226 = vpack.c.b16 %v1216, %v1214
        %v1227 = vpack.c.b16 %v1219, %v1217
        %v1228 = vpack.c.b16 %v1220, %v1218
        %1237 = vmatprep.subr.bf16.mxu0 0
        %1238 = vmatpush1.bf16.msra.mxu0 %v700
        %1239 = vmatprep.subr.bf16.mxu0 0
        %1240 = vmatpush1.bf16.msra.mxu0 %v699
        %1241 = vmatprep.subr.bf16.mxu0 0
        %1242 = vmatpush1.bf16.msra.mxu0 %v698
        %1243 = vmatprep.subr.bf16.mxu0 0
        %1244 = vmatpush1.bf16.msra.mxu0 %v697
        %1245 = vmatprep.subr.bf16.mxu0 0
        %1246 = vmatpush1.bf16.msra.mxu0 %v696
        %1247 = vmatprep.subr.bf16.mxu0 0
        %1248 = vmatpush1.bf16.msra.mxu0 %v695
        %1249 = vmatprep.subr.bf16.mxu0 0
        %1250 = vmatpush1.bf16.msra.mxu0 %v694
        %1251 = vmatprep.subr.bf16.mxu0 0
        %1252 = vmatpush1.bf16.msra.mxu0 %v693
        %1253 = vmatprep.subr.bf16.mxu0 0
        %1254 = vmatpush2.bf16.msra.mxu0 %v708
        %1255 = vmatprep.subr.bf16.mxu0 0
        %1256 = vmatpush2.bf16.msra.mxu0 %v707
        %1257 = vmatprep.subr.bf16.mxu0 0
        %1258 = vmatpush2.bf16.msra.mxu0 %v706
        %1259 = vmatprep.subr.bf16.mxu0 0
        %1260 = vmatpush2.bf16.msra.mxu0 %v705
        %1261 = vmatprep.subr.bf16.mxu0 0
        %1262 = vmatpush2.bf16.msra.mxu0 %v704
        %1263 = vmatprep.subr.bf16.mxu0 0
        %1264 = vmatpush2.bf16.msra.mxu0 %v703
        %1265 = vmatprep.subr.bf16.mxu0 0
        %1266 = vmatpush2.bf16.msra.mxu0 %v702
        %1267 = vmatprep.subr.bf16.mxu0 0
        %1268 = vmatpush2.bf16.msra.mxu0 %v701
        %1269 = vmatprep.mubr.bf16.mxu0 %v1222
        %1270 = vmatmul.mubr.bf16.gmra.mxu0 %v1221
        %v1271 = vpop.f32.mrf.mxu0
        %v1272 = vadd.f32 0.0, %v1271
        %v1273 = vpop.f32.mrf.mxu0
        %v1274 = vpop.f32.mrf.mxu0
        %v1275 = vadd.f32 0.0, %v1274
        %v1276 = vpop.f32.mrf.mxu0
        %1277 = vmatprep.mubr.bf16.mxu0 %v1224
        %1278 = vmatmul.mubr.bf16.gmra.mxu0 %v1223
        %v1279 = vpop.f32.mrf.mxu0
        %v1280 = vadd.f32 0.0, %v1279
        %v1281 = vpop.f32.mrf.mxu0
        %v1282 = vpop.f32.mrf.mxu0
        %v1283 = vadd.f32 0.0, %v1282
        %v1284 = vpop.f32.mrf.mxu0
        %1285 = vmatprep.mubr.bf16.mxu0 %v1226
        %1286 = vmatmul.mubr.bf16.gmra.mxu0 %v1225
        %v1287 = vpop.f32.mrf.mxu0
        %v1288 = vadd.f32 0.0, %v1287
        %v1289 = vpop.f32.mrf.mxu0
        %v1290 = vpop.f32.mrf.mxu0
        %v1291 = vadd.f32 0.0, %v1290
        %v1292 = vpop.f32.mrf.mxu0
        %1293 = vmatprep.mubr.bf16.mxu0 %v1228
        %1294 = vmatmul.mubr.bf16.gmra.mxu0 %v1227
        %v1295 = vpop.f32.mrf.mxu0
        %v1296 = vadd.f32 0.0, %v1295
        %v1297 = vpop.f32.mrf.mxu0
        %v1298 = vpop.f32.mrf.mxu0
        %v1299 = vadd.f32 0.0, %v1298
        %v1300 = vpop.f32.mrf.mxu0
        %1301 = vdwg.mxu0
        %v1302 = vmax.f32 %v1180, %v1272
        %v1303 = vmax.f32 %v1181, %v1275
        %v1304 = vmax.f32 %v1182, %v1280
        %v1305 = vmax.f32 %v1183, %v1283
        %v1306 = vmax.f32 %v1184, %v1288
        %v1307 = vmax.f32 %v1185, %v1291
        %v1308 = vmax.f32 %v1186, %v1296
        %v1309 = vmax.f32 %v1187, %v1299
        %s1310 = scalar_lea.vmem [#allocation2], 320
        %v1311 = vld [vmem:[%s1310] sm:$0xff]
        %v1312 = vld [vmem:[%s1310 + $0x8] sm:$0xff]
        %v1313 = vld [vmem:[%s1310 + $0x10] sm:$0xff]
        %v1314 = vld [vmem:[%s1310 + $0x18] sm:$0xff]
        %v1315 = vld [vmem:[%s1310 + $0x20] sm:$0xff]
        %v1316 = vld [vmem:[%s1310 + $0x28] sm:$0xff]
        %v1317 = vld [vmem:[%s1310 + $0x30] sm:$0xff]
        %v1318 = vld [vmem:[%s1310 + $0x38] sm:$0xff]
        %v1327 = vunpack.c.l.b16 %v1311
        %v1328 = vunpack.c.h.b16 %v1311
        %v1329 = vunpack.c.l.b16 %v1312
        %v1330 = vunpack.c.h.b16 %v1312
        %v1331 = vunpack.c.l.b16 %v1313
        %v1332 = vunpack.c.h.b16 %v1313
        %v1333 = vunpack.c.l.b16 %v1314
        %v1334 = vunpack.c.h.b16 %v1314
        %v1335 = vunpack.c.l.b16 %v1315
        %v1336 = vunpack.c.h.b16 %v1315
        %v1337 = vunpack.c.l.b16 %v1316
        %v1338 = vunpack.c.h.b16 %v1316
        %v1339 = vunpack.c.l.b16 %v1317
        %v1340 = vunpack.c.h.b16 %v1317
        %v1341 = vunpack.c.l.b16 %v1318
        %v1342 = vunpack.c.h.b16 %v1318
        %v1343 = vpack.c.b16 %v1329, %v1327
        %v1344 = vpack.c.b16 %v1330, %v1328
        %v1345 = vpack.c.b16 %v1333, %v1331
        %v1346 = vpack.c.b16 %v1334, %v1332
        %v1347 = vpack.c.b16 %v1337, %v1335
        %v1348 = vpack.c.b16 %v1338, %v1336
        %v1349 = vpack.c.b16 %v1341, %v1339
        %v1350 = vpack.c.b16 %v1342, %v1340
        %1359 = vmatprep.subr.bf16.mxu0 0
        %1360 = vmatpush1.bf16.msra.mxu0 %v700
        %1361 = vmatprep.subr.bf16.mxu0 0
        %1362 = vmatpush1.bf16.msra.mxu0 %v699
        %1363 = vmatprep.subr.bf16.mxu0 0
        %1364 = vmatpush1.bf16.msra.mxu0 %v698
        %1365 = vmatprep.subr.bf16.mxu0 0
        %1366 = vmatpush1.bf16.msra.mxu0 %v697
        %1367 = vmatprep.subr.bf16.mxu0 0
        %1368 = vmatpush1.bf16.msra.mxu0 %v696
        %1369 = vmatprep.subr.bf16.mxu0 0
        %1370 = vmatpush1.bf16.msra.mxu0 %v695
        %1371 = vmatprep.subr.bf16.mxu0 0
        %1372 = vmatpush1.bf16.msra.mxu0 %v694
        %1373 = vmatprep.subr.bf16.mxu0 0
        %1374 = vmatpush1.bf16.msra.mxu0 %v693
        %1375 = vmatprep.subr.bf16.mxu0 0
        %1376 = vmatpush2.bf16.msra.mxu0 %v708
        %1377 = vmatprep.subr.bf16.mxu0 0
        %1378 = vmatpush2.bf16.msra.mxu0 %v707
        %1379 = vmatprep.subr.bf16.mxu0 0
        %1380 = vmatpush2.bf16.msra.mxu0 %v706
        %1381 = vmatprep.subr.bf16.mxu0 0
        %1382 = vmatpush2.bf16.msra.mxu0 %v705
        %1383 = vmatprep.subr.bf16.mxu0 0
        %1384 = vmatpush2.bf16.msra.mxu0 %v704
        %1385 = vmatprep.subr.bf16.mxu0 0
        %1386 = vmatpush2.bf16.msra.mxu0 %v703
        %1387 = vmatprep.subr.bf16.mxu0 0
        %1388 = vmatpush2.bf16.msra.mxu0 %v702
        %1389 = vmatprep.subr.bf16.mxu0 0
        %1390 = vmatpush2.bf16.msra.mxu0 %v701
        %1391 = vmatprep.mubr.bf16.mxu0 %v1344
        %1392 = vmatmul.mubr.bf16.gmra.mxu0 %v1343
        %v1393 = vpop.f32.mrf.mxu0
        %v1394 = vadd.f32 0.0, %v1393
        %v1395 = vpop.f32.mrf.mxu0
        %v1396 = vpop.f32.mrf.mxu0
        %v1397 = vadd.f32 0.0, %v1396
        %v1398 = vpop.f32.mrf.mxu0
        %1399 = vmatprep.mubr.bf16.mxu0 %v1346
        %1400 = vmatmul.mubr.bf16.gmra.mxu0 %v1345
        %v1401 = vpop.f32.mrf.mxu0
        %v1402 = vadd.f32 0.0, %v1401
        %v1403 = vpop.f32.mrf.mxu0
        %v1404 = vpop.f32.mrf.mxu0
        %v1405 = vadd.f32 0.0, %v1404
        %v1406 = vpop.f32.mrf.mxu0
        %1407 = vmatprep.mubr.bf16.mxu0 %v1348
        %1408 = vmatmul.mubr.bf16.gmra.mxu0 %v1347
        %v1409 = vpop.f32.mrf.mxu0
        %v1410 = vadd.f32 0.0, %v1409
        %v1411 = vpop.f32.mrf.mxu0
        %v1412 = vpop.f32.mrf.mxu0
        %v1413 = vadd.f32 0.0, %v1412
        %v1414 = vpop.f32.mrf.mxu0
        %1415 = vmatprep.mubr.bf16.mxu0 %v1350
        %1416 = vmatmul.mubr.bf16.gmra.mxu0 %v1349
        %v1417 = vpop.f32.mrf.mxu0
        %v1418 = vadd.f32 0.0, %v1417
        %v1419 = vpop.f32.mrf.mxu0
        %v1420 = vpop.f32.mrf.mxu0
        %v1421 = vadd.f32 0.0, %v1420
        %v1422 = vpop.f32.mrf.mxu0
        %1423 = vdwg.mxu0
        %v1424 = vmax.f32 %v1302, %v1394
        %v1425 = vmax.f32 %v1303, %v1397
        %v1426 = vmax.f32 %v1304, %v1402
        %v1427 = vmax.f32 %v1305, %v1405
        %v1428 = vmax.f32 %v1306, %v1410
        %v1429 = vmax.f32 %v1307, %v1413
        %v1430 = vmax.f32 %v1308, %v1418
        %v1431 = vmax.f32 %v1309, %v1421
        %s1432 = scalar_lea.vmem [#allocation2], 384
        %v1433 = vld [vmem:[%s1432] sm:$0xff]
        %v1434 = vld [vmem:[%s1432 + $0x8] sm:$0xff]
        %v1435 = vld [vmem:[%s1432 + $0x10] sm:$0xff]
        %v1436 = vld [vmem:[%s1432 + $0x18] sm:$0xff]
        %v1437 = vld [vmem:[%s1432 + $0x20] sm:$0xff]
        %v1438 = vld [vmem:[%s1432 + $0x28] sm:$0xff]
        %v1439 = vld [vmem:[%s1432 + $0x30] sm:$0xff]
        %v1440 = vld [vmem:[%s1432 + $0x38] sm:$0xff]
        %v1449 = vunpack.c.l.b16 %v1433
        %v1450 = vunpack.c.h.b16 %v1433
        %v1451 = vunpack.c.l.b16 %v1434
        %v1452 = vunpack.c.h.b16 %v1434
        %v1453 = vunpack.c.l.b16 %v1435
        %v1454 = vunpack.c.h.b16 %v1435
        %v1455 = vunpack.c.l.b16 %v1436
        %v1456 = vunpack.c.h.b16 %v1436
        %v1457 = vunpack.c.l.b16 %v1437
        %v1458 = vunpack.c.h.b16 %v1437
        %v1459 = vunpack.c.l.b16 %v1438
        %v1460 = vunpack.c.h.b16 %v1438
        %v1461 = vunpack.c.l.b16 %v1439
        %v1462 = vunpack.c.h.b16 %v1439
        %v1463 = vunpack.c.l.b16 %v1440
        %v1464 = vunpack.c.h.b16 %v1440
        %v1465 = vpack.c.b16 %v1451, %v1449
        %v1466 = vpack.c.b16 %v1452, %v1450
        %v1467 = vpack.c.b16 %v1455, %v1453
        %v1468 = vpack.c.b16 %v1456, %v1454
        %v1469 = vpack.c.b16 %v1459, %v1457
        %v1470 = vpack.c.b16 %v1460, %v1458
        %v1471 = vpack.c.b16 %v1463, %v1461
        %v1472 = vpack.c.b16 %v1464, %v1462
        %1481 = vmatprep.subr.bf16.mxu0 0
        %1482 = vmatpush1.bf16.msra.mxu0 %v700
        %1483 = vmatprep.subr.bf16.mxu0 0
        %1484 = vmatpush1.bf16.msra.mxu0 %v699
        %1485 = vmatprep.subr.bf16.mxu0 0
        %1486 = vmatpush1.bf16.msra.mxu0 %v698
        %1487 = vmatprep.subr.bf16.mxu0 0
        %1488 = vmatpush1.bf16.msra.mxu0 %v697
        %1489 = vmatprep.subr.bf16.mxu0 0
        %1490 = vmatpush1.bf16.msra.mxu0 %v696
        %1491 = vmatprep.subr.bf16.mxu0 0
        %1492 = vmatpush1.bf16.msra.mxu0 %v695
        %1493 = vmatprep.subr.bf16.mxu0 0
        %1494 = vmatpush1.bf16.msra.mxu0 %v694
        %1495 = vmatprep.subr.bf16.mxu0 0
        %1496 = vmatpush1.bf16.msra.mxu0 %v693
        %1497 = vmatprep.subr.bf16.mxu0 0
        %1498 = vmatpush2.bf16.msra.mxu0 %v708
        %1499 = vmatprep.subr.bf16.mxu0 0
        %1500 = vmatpush2.bf16.msra.mxu0 %v707
        %1501 = vmatprep.subr.bf16.mxu0 0
        %1502 = vmatpush2.bf16.msra.mxu0 %v706
        %1503 = vmatprep.subr.bf16.mxu0 0
        %1504 = vmatpush2.bf16.msra.mxu0 %v705
        %1505 = vmatprep.subr.bf16.mxu0 0
        %1506 = vmatpush2.bf16.msra.mxu0 %v704
        %1507 = vmatprep.subr.bf16.mxu0 0
        %1508 = vmatpush2.bf16.msra.mxu0 %v703
        %1509 = vmatprep.subr.bf16.mxu0 0
        %1510 = vmatpush2.bf16.msra.mxu0 %v702
        %1511 = vmatprep.subr.bf16.mxu0 0
        %1512 = vmatpush2.bf16.msra.mxu0 %v701
        %1513 = vmatprep.mubr.bf16.mxu0 %v1466
        %1514 = vmatmul.mubr.bf16.gmra.mxu0 %v1465
        %v1515 = vpop.f32.mrf.mxu0
        %v1516 = vadd.f32 0.0, %v1515
        %v1517 = vpop.f32.mrf.mxu0
        %v1518 = vpop.f32.mrf.mxu0
        %v1519 = vadd.f32 0.0, %v1518
        %v1520 = vpop.f32.mrf.mxu0
        %1521 = vmatprep.mubr.bf16.mxu0 %v1468
        %1522 = vmatmul.mubr.bf16.gmra.mxu0 %v1467
        %v1523 = vpop.f32.mrf.mxu0
        %v1524 = vadd.f32 0.0, %v1523
        %v1525 = vpop.f32.mrf.mxu0
        %v1526 = vpop.f32.mrf.mxu0
        %v1527 = vadd.f32 0.0, %v1526
        %v1528 = vpop.f32.mrf.mxu0
        %1529 = vmatprep.mubr.bf16.mxu0 %v1470
        %1530 = vmatmul.mubr.bf16.gmra.mxu0 %v1469
        %v1531 = vpop.f32.mrf.mxu0
        %v1532 = vadd.f32 0.0, %v1531
        %v1533 = vpop.f32.mrf.mxu0
        %v1534 = vpop.f32.mrf.mxu0
        %v1535 = vadd.f32 0.0, %v1534
        %v1536 = vpop.f32.mrf.mxu0
        %1537 = vmatprep.mubr.bf16.mxu0 %v1472
        %1538 = vmatmul.mubr.bf16.gmra.mxu0 %v1471
        %v1539 = vpop.f32.mrf.mxu0
        %v1540 = vadd.f32 0.0, %v1539
        %v1541 = vpop.f32.mrf.mxu0
        %v1542 = vpop.f32.mrf.mxu0
        %v1543 = vadd.f32 0.0, %v1542
        %v1544 = vpop.f32.mrf.mxu0
        %1545 = vdwg.mxu0
        %v1546 = vmax.f32 %v1424, %v1516
        %v1547 = vmax.f32 %v1425, %v1519
        %v1548 = vmax.f32 %v1426, %v1524
        %v1549 = vmax.f32 %v1427, %v1527
        %v1550 = vmax.f32 %v1428, %v1532
        %v1551 = vmax.f32 %v1429, %v1535
        %v1552 = vmax.f32 %v1430, %v1540
        %v1553 = vmax.f32 %v1431, %v1543
        %s1554 = scalar_lea.vmem [#allocation2], 448
        %v1555 = vld [vmem:[%s1554] sm:$0xff]
        %v1556 = vld [vmem:[%s1554 + $0x8] sm:$0xff]
        %v1557 = vld [vmem:[%s1554 + $0x10] sm:$0xff]
        %v1558 = vld [vmem:[%s1554 + $0x18] sm:$0xff]
        %v1559 = vld [vmem:[%s1554 + $0x20] sm:$0xff]
        %v1560 = vld [vmem:[%s1554 + $0x28] sm:$0xff]
        %v1561 = vld [vmem:[%s1554 + $0x30] sm:$0xff]
        %v1562 = vld [vmem:[%s1554 + $0x38] sm:$0xff]
        %v1571 = vunpack.c.l.b16 %v1555
        %v1572 = vunpack.c.h.b16 %v1555
        %v1573 = vunpack.c.l.b16 %v1556
        %v1574 = vunpack.c.h.b16 %v1556
        %v1575 = vunpack.c.l.b16 %v1557
        %v1576 = vunpack.c.h.b16 %v1557
        %v1577 = vunpack.c.l.b16 %v1558
        %v1578 = vunpack.c.h.b16 %v1558
        %v1579 = vunpack.c.l.b16 %v1559
        %v1580 = vunpack.c.h.b16 %v1559
        %v1581 = vunpack.c.l.b16 %v1560
        %v1582 = vunpack.c.h.b16 %v1560
        %v1583 = vunpack.c.l.b16 %v1561
        %v1584 = vunpack.c.h.b16 %v1561
        %v1585 = vunpack.c.l.b16 %v1562
        %v1586 = vunpack.c.h.b16 %v1562
        %v1587 = vpack.c.b16 %v1573, %v1571
        %v1588 = vpack.c.b16 %v1574, %v1572
        %v1589 = vpack.c.b16 %v1577, %v1575
        %v1590 = vpack.c.b16 %v1578, %v1576
        %v1591 = vpack.c.b16 %v1581, %v1579
        %v1592 = vpack.c.b16 %v1582, %v1580
        %v1593 = vpack.c.b16 %v1585, %v1583
        %v1594 = vpack.c.b16 %v1586, %v1584
        %1603 = vmatprep.subr.bf16.mxu0 0
        %1604 = vmatpush1.bf16.msra.mxu0 %v700
        %1605 = vmatprep.subr.bf16.mxu0 0
        %1606 = vmatpush1.bf16.msra.mxu0 %v699
        %1607 = vmatprep.subr.bf16.mxu0 0
        %1608 = vmatpush1.bf16.msra.mxu0 %v698
        %1609 = vmatprep.subr.bf16.mxu0 0
        %1610 = vmatpush1.bf16.msra.mxu0 %v697
        %1611 = vmatprep.subr.bf16.mxu0 0
        %1612 = vmatpush1.bf16.msra.mxu0 %v696
        %1613 = vmatprep.subr.bf16.mxu0 0
        %1614 = vmatpush1.bf16.msra.mxu0 %v695
        %1615 = vmatprep.subr.bf16.mxu0 0
        %1616 = vmatpush1.bf16.msra.mxu0 %v694
        %1617 = vmatprep.subr.bf16.mxu0 0
        %1618 = vmatpush1.bf16.msra.mxu0 %v693
        %1619 = vmatprep.subr.bf16.mxu0 0
        %1620 = vmatpush2.bf16.msra.mxu0 %v708
        %1621 = vmatprep.subr.bf16.mxu0 0
        %1622 = vmatpush2.bf16.msra.mxu0 %v707
        %1623 = vmatprep.subr.bf16.mxu0 0
        %1624 = vmatpush2.bf16.msra.mxu0 %v706
        %1625 = vmatprep.subr.bf16.mxu0 0
        %1626 = vmatpush2.bf16.msra.mxu0 %v705
        %1627 = vmatprep.subr.bf16.mxu0 0
        %1628 = vmatpush2.bf16.msra.mxu0 %v704
        %1629 = vmatprep.subr.bf16.mxu0 0
        %1630 = vmatpush2.bf16.msra.mxu0 %v703
        %1631 = vmatprep.subr.bf16.mxu0 0
        %1632 = vmatpush2.bf16.msra.mxu0 %v702
        %1633 = vmatprep.subr.bf16.mxu0 0
        %1634 = vmatpush2.bf16.msra.mxu0 %v701
        %1635 = vmatprep.mubr.bf16.mxu0 %v1588
        %1636 = vmatmul.mubr.bf16.gmra.mxu0 %v1587
        %v1637 = vpop.f32.mrf.mxu0
        %v1638 = vadd.f32 0.0, %v1637
        %v1639 = vpop.f32.mrf.mxu0
        %v1640 = vpop.f32.mrf.mxu0
        %v1641 = vadd.f32 0.0, %v1640
        %v1642 = vpop.f32.mrf.mxu0
        %1643 = vmatprep.mubr.bf16.mxu0 %v1590
        %1644 = vmatmul.mubr.bf16.gmra.mxu0 %v1589
        %v1645 = vpop.f32.mrf.mxu0
        %v1646 = vadd.f32 0.0, %v1645
        %v1647 = vpop.f32.mrf.mxu0
        %v1648 = vpop.f32.mrf.mxu0
        %v1649 = vadd.f32 0.0, %v1648
        %v1650 = vpop.f32.mrf.mxu0
        %1651 = vmatprep.mubr.bf16.mxu0 %v1592
        %1652 = vmatmul.mubr.bf16.gmra.mxu0 %v1591
        %v1653 = vpop.f32.mrf.mxu0
        %v1654 = vadd.f32 0.0, %v1653
        %v1655 = vpop.f32.mrf.mxu0
        %v1656 = vpop.f32.mrf.mxu0
        %v1657 = vadd.f32 0.0, %v1656
        %v1658 = vpop.f32.mrf.mxu0
        %1659 = vmatprep.mubr.bf16.mxu0 %v1594
        %1660 = vmatmul.mubr.bf16.gmra.mxu0 %v1593
        %v1661 = vpop.f32.mrf.mxu0
        %v1662 = vadd.f32 0.0, %v1661
        %v1663 = vpop.f32.mrf.mxu0
        %v1664 = vpop.f32.mrf.mxu0
        %v1665 = vadd.f32 0.0, %v1664
        %v1666 = vpop.f32.mrf.mxu0
        %1667 = vdwg.mxu0
        %v1668 = vmax.f32 %v1546, %v1638
        %v1669 = vmax.f32 %v1547, %v1641
        %v1670 = vmax.f32 %v1548, %v1646
        %v1671 = vmax.f32 %v1549, %v1649
        %v1672 = vmax.f32 %v1550, %v1654
        %v1673 = vmax.f32 %v1551, %v1657
        %v1674 = vmax.f32 %v1552, %v1662
        %v1675 = vmax.f32 %v1553, %v1665
        %s1676 = scalar_lea.vmem [#allocation2], 512
        %v1677 = vld [vmem:[%s1676] sm:$0xff]
        %v1678 = vld [vmem:[%s1676 + $0x8] sm:$0xff]
        %v1679 = vld [vmem:[%s1676 + $0x10] sm:$0xff]
        %v1680 = vld [vmem:[%s1676 + $0x18] sm:$0xff]
        %v1681 = vld [vmem:[%s1676 + $0x20] sm:$0xff]
        %v1682 = vld [vmem:[%s1676 + $0x28] sm:$0xff]
        %v1683 = vld [vmem:[%s1676 + $0x30] sm:$0xff]
        %v1684 = vld [vmem:[%s1676 + $0x38] sm:$0xff]
        %v1693 = vunpack.c.l.b16 %v1677
        %v1694 = vunpack.c.h.b16 %v1677
        %v1695 = vunpack.c.l.b16 %v1678
        %v1696 = vunpack.c.h.b16 %v1678
        %v1697 = vunpack.c.l.b16 %v1679
        %v1698 = vunpack.c.h.b16 %v1679
        %v1699 = vunpack.c.l.b16 %v1680
        %v1700 = vunpack.c.h.b16 %v1680
        %v1701 = vunpack.c.l.b16 %v1681
        %v1702 = vunpack.c.h.b16 %v1681
        %v1703 = vunpack.c.l.b16 %v1682
        %v1704 = vunpack.c.h.b16 %v1682
        %v1705 = vunpack.c.l.b16 %v1683
        %v1706 = vunpack.c.h.b16 %v1683
        %v1707 = vunpack.c.l.b16 %v1684
        %v1708 = vunpack.c.h.b16 %v1684
        %v1709 = vpack.c.b16 %v1695, %v1693
        %v1710 = vpack.c.b16 %v1696, %v1694
        %v1711 = vpack.c.b16 %v1699, %v1697
        %v1712 = vpack.c.b16 %v1700, %v1698
        %v1713 = vpack.c.b16 %v1703, %v1701
        %v1714 = vpack.c.b16 %v1704, %v1702
        %v1715 = vpack.c.b16 %v1707, %v1705
        %v1716 = vpack.c.b16 %v1708, %v1706
        %1725 = vmatprep.subr.bf16.mxu0 0
        %1726 = vmatpush1.bf16.msra.mxu0 %v700
        %1727 = vmatprep.subr.bf16.mxu0 0
        %1728 = vmatpush1.bf16.msra.mxu0 %v699
        %1729 = vmatprep.subr.bf16.mxu0 0
        %1730 = vmatpush1.bf16.msra.mxu0 %v698
        %1731 = vmatprep.subr.bf16.mxu0 0
        %1732 = vmatpush1.bf16.msra.mxu0 %v697
        %1733 = vmatprep.subr.bf16.mxu0 0
        %1734 = vmatpush1.bf16.msra.mxu0 %v696
        %1735 = vmatprep.subr.bf16.mxu0 0
        %1736 = vmatpush1.bf16.msra.mxu0 %v695
        %1737 = vmatprep.subr.bf16.mxu0 0
        %1738 = vmatpush1.bf16.msra.mxu0 %v694
        %1739 = vmatprep.subr.bf16.mxu0 0
        %1740 = vmatpush1.bf16.msra.mxu0 %v693
        %1741 = vmatprep.subr.bf16.mxu0 0
        %1742 = vmatpush2.bf16.msra.mxu0 %v708
        %1743 = vmatprep.subr.bf16.mxu0 0
        %1744 = vmatpush2.bf16.msra.mxu0 %v707
        %1745 = vmatprep.subr.bf16.mxu0 0
        %1746 = vmatpush2.bf16.msra.mxu0 %v706
        %1747 = vmatprep.subr.bf16.mxu0 0
        %1748 = vmatpush2.bf16.msra.mxu0 %v705
        %1749 = vmatprep.subr.bf16.mxu0 0
        %1750 = vmatpush2.bf16.msra.mxu0 %v704
        %1751 = vmatprep.subr.bf16.mxu0 0
        %1752 = vmatpush2.bf16.msra.mxu0 %v703
        %1753 = vmatprep.subr.bf16.mxu0 0
        %1754 = vmatpush2.bf16.msra.mxu0 %v702
        %1755 = vmatprep.subr.bf16.mxu0 0
        %1756 = vmatpush2.bf16.msra.mxu0 %v701
        %1757 = vmatprep.mubr.bf16.mxu0 %v1710
        %1758 = vmatmul.mubr.bf16.gmra.mxu0 %v1709
        %v1759 = vpop.f32.mrf.mxu0
        %v1760 = vadd.f32 0.0, %v1759
        %v1761 = vpop.f32.mrf.mxu0
        %v1762 = vpop.f32.mrf.mxu0
        %v1763 = vadd.f32 0.0, %v1762
        %v1764 = vpop.f32.mrf.mxu0
        %1765 = vmatprep.mubr.bf16.mxu0 %v1712
        %1766 = vmatmul.mubr.bf16.gmra.mxu0 %v1711
        %v1767 = vpop.f32.mrf.mxu0
        %v1768 = vadd.f32 0.0, %v1767
        %v1769 = vpop.f32.mrf.mxu0
        %v1770 = vpop.f32.mrf.mxu0
        %v1771 = vadd.f32 0.0, %v1770
        %v1772 = vpop.f32.mrf.mxu0
        %1773 = vmatprep.mubr.bf16.mxu0 %v1714
        %1774 = vmatmul.mubr.bf16.gmra.mxu0 %v1713
        %v1775 = vpop.f32.mrf.mxu0
        %v1776 = vadd.f32 0.0, %v1775
        %v1777 = vpop.f32.mrf.mxu0
        %v1778 = vpop.f32.mrf.mxu0
        %v1779 = vadd.f32 0.0, %v1778
        %v1780 = vpop.f32.mrf.mxu0
        %1781 = vmatprep.mubr.bf16.mxu0 %v1716
        %1782 = vmatmul.mubr.bf16.gmra.mxu0 %v1715
        %v1783 = vpop.f32.mrf.mxu0
        %v1784 = vadd.f32 0.0, %v1783
        %v1785 = vpop.f32.mrf.mxu0
        %v1786 = vpop.f32.mrf.mxu0
        %v1787 = vadd.f32 0.0, %v1786
        %v1788 = vpop.f32.mrf.mxu0
        %1789 = vdwg.mxu0
        %v1790 = vmax.f32 %v1668, %v1760
        %v1791 = vmax.f32 %v1669, %v1763
        %v1792 = vmax.f32 %v1670, %v1768
        %v1793 = vmax.f32 %v1671, %v1771
        %v1794 = vmax.f32 %v1672, %v1776
        %v1795 = vmax.f32 %v1673, %v1779
        %v1796 = vmax.f32 %v1674, %v1784
        %v1797 = vmax.f32 %v1675, %v1787
        %v1798 = vpack.c.bf16 %v1791, %v1790
        %v1799 = vpack.c.bf16 %v1793, %v1792
        %v1800 = vpack.c.bf16 %v1795, %v1794
        %v1801 = vpack.c.bf16 %v1797, %v1796
        %v1806 = vunpack.c.l.b16 %v1798
        %v1807 = vunpack.c.h.b16 %v1798
        %v1808 = vunpack.c.l.b16 %v1799
        %v1809 = vunpack.c.h.b16 %v1799
        %v1810 = vunpack.c.l.b16 %v1800
        %v1811 = vunpack.c.h.b16 %v1800
        %v1812 = vunpack.c.l.b16 %v1801
        %v1813 = vunpack.c.h.b16 %v1801
        %v1814 = vpack.c.b16 %v1806, %v1806
        %v1815 = vpack.c.b16 %v1807, %v1807
        %v1816 = vpack.c.b16 %v1808, %v1808
        %v1817 = vpack.c.b16 %v1809, %v1809
        %v1818 = vpack.c.b16 %v1810, %v1810
        %v1819 = vpack.c.b16 %v1811, %v1811
        %v1820 = vpack.c.b16 %v1812, %v1812
        %v1821 = vpack.c.b16 %v1813, %v1813
        %1830 = vst [vmem:[%s232] sm:$0xf] %v1814
        %1831 = vst [vmem:[%s232 + $0x4] sm:$0xf] %v1815
        %1832 = vst [vmem:[%s232 + $0x8] sm:$0xf] %v1816
        %1833 = vst [vmem:[%s232 + $0xc] sm:$0xf] %v1817
        %1834 = vst [vmem:[%s232 + $0x10] sm:$0xf] %v1818
        %1835 = vst [vmem:[%s232 + $0x14] sm:$0xf] %v1819
        %1836 = vst [vmem:[%s232 + $0x18] sm:$0xf] %v1820
        %1837 = vst [vmem:[%s232 + $0x1c] sm:$0xf] %v1821
        %s1838 = sand.u32 %s138, 1
        %s1839 = scalar_lea.sflag [#allocation4], %s1838
        %s1840 = sand.u32 %s138, 1
        %s1841 = smul.addr %s1840, 32
        %s1842 = scalar_lea.vmem [#allocation5], %s1841
        // Predicated region
        $region45: #{tpu_custom_call.1} parent=39 // pred_check
          %p1843 = pneg %p148
        $region46: #{tpu_custom_call.1} parent=39 // pred_check_branch
          %1845 = sbr.rel (%p1843) target = $region48
        $region47: #{tpu_custom_call.1} parent=39 // pred_region
          %s1847 = ssub.s32 512, 512
          %1848 = vsyncadd %s1839, %s1847
          %s1849 = smul.addr %s20, 8
          %s1850 = smul.addr %s1849, 64
          %s1851 = scalar_lea.hbm %s5, %s1850
          %s1852 = sshll.u32 %s1842, 4
          %s1853 = int_to_ptr.vmem [resolvable:$true] %s1852
          %1858 = dma.vmem_to_hbm [thread:$0]  %s1853, 512, %s1851, %s1839, 64, 64, 4
        $region48: #{tpu_custom_call.1} parent=39 // pred_fallthru
          _
      $region40: #{tpu_custom_call.1} parent=5 // pred_fallthru
        _
      %p1859 = scmp.le.s32.totalorder 2, %s15
      // Predicated region
      $region49: #{tpu_custom_call.1} parent=5 // pred_check
        %p1860 = pneg %p1859
      $region50: #{tpu_custom_call.1} parent=5 // pred_check_branch
        %1862 = sbr.rel (%p1860) target = $region52
      $region51: #{tpu_custom_call.1} parent=5 // pred_region
        %s1863 = ssub.s32 %s15, 2
        // Predicated region
        $region53: #{tpu_custom_call.1} parent=51 // pred_check
          %p1864 = pneg %p154
        $region54: #{tpu_custom_call.1} parent=51 // pred_check_branch
          %1866 = sbr.rel (%p1864) target = $region56
        $region55: #{tpu_custom_call.1} parent=51 // pred_region
          %s1867 = sand.u32 %s139, 1
          %s1868 = scalar_lea.sflag [#allocation4], %s1867
          %s1869 = sand.u32 %s139, 1
          %s1870 = smul.addr %s1869, 32
          %s1871 = scalar_lea.vmem [#allocation5], %s1870
          %1872 = dma.done %s1868, 512
        $region56: #{tpu_custom_call.1} parent=51 // pred_fallthru
          _
      $region52: #{tpu_custom_call.1} parent=5 // pred_fallthru
        _
    $region6: #{tpu_custom_call.1} parent=1 // loop_footer
      %s19 = sadd.s32 1, %s15
    $region7: #{tpu_custom_call.1} parent=1 // loop_footer_branch
      %14 = sbr.rel target = $region3
    $region8: #{tpu_custom_call.1} parent=1 // loop_exit
      _
    %1873 = vsyncpa [#allocation3], 1
    %s1874 = scalar_lea.sflag [#allocation3], 1
    %1875 = vsyncpa %s1874, 1
    %1876 = vsyncpa [#allocation4], 1
    %s1877 = scalar_lea.sflag [#allocation4], 1
    %1878 = vsyncpa %s1877, 1

</llo_original>
